<compile_context>
chip_gen: v7x
topology: tpu7x:2x2x1
jax: 0.10.0
libtpu: 0.0.40
codegen_flags: <defaults>
</compile_context>

<pallas_src>
import numpy as np
import jax
import jax.numpy as jnp
from jax.experimental import pallas as pl
from jax.experimental.pallas import tpu as pltpu


# ----------------------------- problem sizes --------------------------------
N = 2                        # batch
C0, C1, C2, C3 = 4, 8, 8, 4  # channels through the 3 layers
H = W = 16                   # spatial
LEAKY = 0.1                  # LeakyReLU negative slope of the BN blocks


# ------------------------------ fused kernel --------------------------------
def _fused_yolo_kernel(x_ref, w1_ref, b1_ref, w2_ref, b2_ref, w3_ref, b3_ref,
                       o_ref):
    """All three conv layers for the whole batch; activations stay in values.

    x_ref : (N*H, W*C0)        lane-dense input slab  [n*H+h, w*C0+ci]
    w*_ref: (3, W*Cin, W*Cout) banded weights [ky, w_in*Cin+ci, w_out*Cout+co]
                               (kx shifts + zero width-padding folded in)
    b*_ref: (1, W*Cout)        bias tiled over w (BN already folded in)
    o_ref : (N*H, W*C3)        lane-dense output slab [n*H+h, w*C3+co]
    """
    f32 = jnp.float32
    rows = x_ref.shape[0]                       # N*H (batch folded into rows)

    def conv3x3(a, w_ref):
        # centre tap (ky=1): no row shift — also initialises the accumulator.
        acc = jnp.dot(a, w_ref[1], preferred_element_type=f32)
        # per-image row index (0..H-1); used to zero the halo rows after rolls.
        h = jax.lax.broadcasted_iota(jnp.int32, acc.shape, 0) % H

        # ky=0: out[r] += (a @ w[0])[r-1]; invalid at each image's first row.
        top = pltpu.roll(jnp.dot(a, w_ref[0], preferred_element_type=f32),
                         shift=1, axis=0)
        acc = acc + jnp.where(h > 0, top, 0.0)

        # ky=2: out[r] += (a @ w[2])[r+1]; invalid at each image's last row.
        bot = pltpu.roll(jnp.dot(a, w_ref[2], preferred_element_type=f32),
                         shift=rows - 1, axis=0)
        acc = acc + jnp.where(h < H - 1, bot, 0.0)
        return acc

    # ---- layer 1: Conv + (folded) BN + LeakyReLU ----------------------------
    a = conv3x3(x_ref[...], w1_ref) + b1_ref[...]
    a = jnp.where(a > 0, a, LEAKY * a)          # LeakyReLU, f32 on the VPU
    # ---- layer 2: Conv + (folded) BN + LeakyReLU ----------------------------
    a = conv3x3(a, w2_ref) + b2_ref[...]
    a = jnp.where(a > 0, a, LEAKY * a)
    # ---- layer 3: plain Conv + bias (detection head); single store ----------
    # NOTE: W*C3 = 64 lanes (< 128) -> masked vst; negligible at this width.
    o_ref[...] = (conv3x3(a, w3_ref) + b3_ref[...]).astype(o_ref.dtype)


# ------------------------------ host wrapper ---------------------------------
def _fused_forward(x_nchw, params):
    w1, b1, w2, b2, w3, b3 = params
    n = x_nchw.shape[0]
    # NCHW -> lane-dense (N*H, W*C0) slab; a few-KB transpose under jit.
    x_slab = jnp.transpose(x_nchw, (0, 2, 3, 1)).reshape(n * H, W * C0)

    out_flat = pl.pallas_call(
        _fused_yolo_kernel,
        out_shape=jax.ShapeDtypeStruct((n * H, W * C3), jnp.float32),
        grid=(1,),
        in_specs=[
            pl.BlockSpec((n * H, W * C0), lambda i: (0, 0)),
            pl.BlockSpec((3, W * C0, W * C1), lambda i: (0, 0, 0)),
            pl.BlockSpec((1, W * C1), lambda i: (0, 0)),
            pl.BlockSpec((3, W * C1, W * C2), lambda i: (0, 0, 0)),
            pl.BlockSpec((1, W * C2), lambda i: (0, 0)),
            pl.BlockSpec((3, W * C2, W * C3), lambda i: (0, 0, 0)),
            pl.BlockSpec((1, W * C3), lambda i: (0, 0)),
        ],
        out_specs=pl.BlockSpec((n * H, W * C3), lambda i: (0, 0)),
        compiler_params=pltpu.CompilerParams(
            dimension_semantics=("arbitrary",)),
    )(x_slab, w1, b1, w2, b2, w3, b3)

    # lane-dense (N*H, W*C3) slab -> NCHW to match the PyTorch convention.
    return out_flat.reshape(n, H, W, C3).transpose(0, 3, 1, 2)


@jax.jit
def mynn_forward(x_nchw, params):
    """Equivalent of MyNN.forward: the whole sequential module_list, fused."""
    return _fused_forward(x_nchw.astype(jnp.float32), params)


# -------------------- parameter packing (host, done once) --------------------
def _kx_band_selector(width):
    """sel[kx, w_in, w_out] = 1 where w_in == w_out + kx - 1 and inside image."""
    sel = np.zeros((3, width, width), np.float32)
    for kx in range(3):
        for w_out in range(width):
            w_in = w_out + kx - 1
            if 0 <= w_in < width:
                sel[kx, w_in, w_out] = 1.0
    return jnp.asarray(sel)


def _band_weights_flat(w_taps, width):
    """(9, Cin, Cout) taps (k = ky*3+kx)  ->  (3, W*Cin, W*Cout) banded mats."""
    cin, cout = w_taps.shape[1], w_taps.shape[2]
    w = w_taps.reshape(3, 3, cin, cout)                       # (ky, kx, ci, co)
    band = jnp.einsum('kab,ykcd->yacbd', _kx_band_selector(width), w)
    return band.reshape(3, width * cin, width * cout)


def _fold_bn(w_taps, b, gamma, beta, mean, var, eps=1e-5):
    """Fold BatchNorm2d (eval / running-stats) into conv weights and bias."""
    scale = gamma / jnp.sqrt(var + eps)
    return w_taps * scale[None, None, :], (b - mean) * scale + beta


def init_params(key):
    """Synthetic Darknet-style parameters.

    Returns (kernel_params, ref_layers): kernel_params are the banded/lane-flat
    tensors consumed by the Pallas kernel; ref_layers [(taps, bias, slope)] are
    used by the pure-JAX reference check.
    """
    chans = [(C0, C1), (C1, C2), (C2, C3)]
    ref_layers = []
    for li, (cin, cout) in enumerate(chans):
        key, kw = jax.random.split(key)
        w = jax.random.normal(kw, (9, cin, cout), jnp.float32) * 0.1
        b = jnp.zeros((cout,), jnp.float32)
        if li < 2:   # Conv + BN + LeakyReLU blocks
            gamma = jnp.ones((cout,), jnp.float32) * 1.1
            beta = jnp.full((cout,), 0.05, jnp.float32)
            mean = jnp.full((cout,), 0.02, jnp.float32)
            var = jnp.full((cout,), 0.9, jnp.float32)
            w, b = _fold_bn(w, b, gamma, beta, mean, var)
            ref_layers.append((w, b, LEAKY))
        else:        # plain conv + bias detection head
            key, kb = jax.random.split(key)
            b = jax.random.normal(kb, (cout,), jnp.float32) * 0.01
            ref_layers.append((w, b, None))

    (w1, b1, _), (w2, b2, _), (w3, b3, _) = ref_layers
    kernel_params = (
        _band_weights_flat(w1, W),                 # (3, W*C0, W*C1)
        jnp.tile(b1, W).reshape(1, W * C1),
        _band_weights_flat(w2, W),                 # (3, W*C1, W*C2)
        jnp.tile(b2, W).reshape(1, W * C2),
        _band_weights_flat(w3, W),                 # (3, W*C2, W*C3)
        jnp.tile(b3, W).reshape(1, W * C3),
    )
    return kernel_params, ref_layers


def _reference_forward(x_nchw, ref_layers):
    """Pure-JAX (XLA conv) reference of the same sequential module_list."""
    x = jnp.transpose(x_nchw, (0, 2, 3, 1)).astype(jnp.float32)      # NHWC
    for taps, b, slope in ref_layers:
        cin, cout = taps.shape[1], taps.shape[2]
        k = taps.reshape(3, 3, cin, cout)                            # HWIO
        x = jax.lax.conv_general_dilated(
            x, k, window_strides=(1, 1), padding='SAME',
            dimension_numbers=('NHWC', 'HWIO', 'NHWC'),
            precision=jax.lax.Precision.HIGHEST)
        x = x + b
        if slope is not None:
            x = jnp.where(x > 0, x, slope * x)
    return jnp.transpose(x, (0, 3, 1, 2))                            # NCHW


if __name__ == "__main__":
    x = jax.random.normal(jax.random.PRNGKey(0), (N, C0, H, W), jnp.float32)
    kernel_params, ref_layers = init_params(jax.random.PRNGKey(42))

    out = mynn_forward(x, kernel_params)
    jax.block_until_ready(out)
    assert out.shape == (N, C3, H, W), out.shape

    ref = _reference_forward(x, ref_layers)
    # Tight enough (outputs are O(0.1-1)) that any banded-weight / halo-roll
    # indexing mistake fails loudly, while leaving headroom for MXU f32
    # pass-decomposition vs. the HIGHEST-precision XLA conv reference.
    np.testing.assert_allclose(np.asarray(out), np.asarray(ref),
                               rtol=1e-2, atol=1e-2)
    print("KERNEL_OK")
</pallas_src>

<mosaic_0001>
module attributes {stable_mosaic.version = 11 : i64} {
  func.func @_fused_yolo_kernel(%arg0: i32, %arg1: memref<32x64xf32, #tpu.memory_space<vmem>>, %arg2: memref<3x64x128xf32, #tpu.memory_space<vmem>>, %arg3: memref<1x128xf32, #tpu.memory_space<vmem>>, %arg4: memref<3x128x128xf32, #tpu.memory_space<vmem>>, %arg5: memref<1x128xf32, #tpu.memory_space<vmem>>, %arg6: memref<3x128x64xf32, #tpu.memory_space<vmem>>, %arg7: memref<1x64xf32, #tpu.memory_space<vmem>>, %arg8: memref<32x64xf32, #tpu.memory_space<vmem>>) attributes {dimension_semantics = [#tpu.dimension_semantics<arbitrary>], iteration_bounds = array<i64: 1>, scalar_prefetch = 0 : i64, scratch_operands = 0 : i64, tpu.core_type = #tpu.core_type<tc>, window_params = [{pipeline_mode = #tpu.pipeline_mode<synchronous>, transform_indices = @transform_0, window_bounds = array<i64: 32, 64>}, {pipeline_mode = #tpu.pipeline_mode<synchronous>, transform_indices = @transform_1, window_bounds = array<i64: 3, 64, 128>}, {pipeline_mode = #tpu.pipeline_mode<synchronous>, transform_indices = @transform_2, window_bounds = array<i64: 1, 128>}, {pipeline_mode = #tpu.pipeline_mode<synchronous>, transform_indices = @transform_3, window_bounds = array<i64: 3, 128, 128>}, {pipeline_mode = #tpu.pipeline_mode<synchronous>, transform_indices = @transform_4, window_bounds = array<i64: 1, 128>}, {pipeline_mode = #tpu.pipeline_mode<synchronous>, transform_indices = @transform_5, window_bounds = array<i64: 3, 128, 64>}, {pipeline_mode = #tpu.pipeline_mode<synchronous>, transform_indices = @transform_6, window_bounds = array<i64: 1, 64>}, {pipeline_mode = #tpu.pipeline_mode<synchronous>, transform_indices = @transform_7, window_bounds = array<i64: 32, 64>}]} {
    %c0 = arith.constant 0 : index
    %c0_0 = arith.constant 0 : index
    %0 = vector.load %arg1[%c0, %c0_0] : memref<32x64xf32, #tpu.memory_space<vmem>>, vector<32x64xf32>
    %c1 = arith.constant 1 : index
    %c0_1 = arith.constant 0 : index
    %c0_2 = arith.constant 0 : index
    %1 = vector.load %arg2[%c1, %c0_1, %c0_2] : memref<3x64x128xf32, #tpu.memory_space<vmem>>, vector<1x64x128xf32>
    %2 = vector.shape_cast %1 : vector<1x64x128xf32> to vector<64x128xf32>
    %cst = arith.constant dense<0.000000e+00> : vector<32x128xf32>
    %3 = tpu.matmul %0, %2, %cst {dimension_numbers = #tpu.dot_dimension_numbers<[1], [0], [0], [1], [0, 0, 1, 1], [], []>} : vector<32x64xf32>, vector<64x128xf32>, vector<32x128xf32> -> vector<32x128xf32>
    %4 = tpu.iota {dimensions = array<i32: 0>} : vector<32x128xi32>
    %c16_i32 = arith.constant 16 : i32
    %c0_i32 = arith.constant 0 : i32
    %5 = arith.cmpi eq, %c16_i32, %c0_i32 : i32
    %c1_i32 = arith.constant 1 : i32
    %6 = arith.select %5, %c1_i32, %c16_i32 : i32
    %7 = vector.broadcast %6 : i32 to vector<32x128xi32>
    %8 = arith.remsi %4, %7 : vector<32x128xi32>
    %c0_i32_3 = arith.constant 0 : i32
    %9 = vector.broadcast %c0_i32_3 : i32 to vector<32x128xi32>
    %10 = arith.cmpi ne, %8, %9 : vector<32x128xi32>
    %c0_i32_4 = arith.constant 0 : i32
    %11 = vector.broadcast %c0_i32_4 : i32 to vector<32x128xi32>
    %12 = arith.cmpi slt, %8, %11 : vector<32x128xi32>
    %c0_i32_5 = arith.constant 0 : i32
    %13 = arith.cmpi slt, %6, %c0_i32_5 : i32
    %14 = vector.broadcast %13 : i1 to vector<32x128xi1>
    %15 = vector.broadcast %14 : vector<32x128xi1> to vector<32x128xi1>
    %16 = arith.xori %12, %15 : vector<32x128xi1>
    %17 = arith.andi %16, %10 : vector<32x128xi1>
    %18 = vector.broadcast %6 : i32 to vector<32x128xi32>
    %19 = arith.addi %8, %18 : vector<32x128xi32>
    %20 = arith.select %17, %19, %8 : vector<32x128xi1>, vector<32x128xi32>
    %c0_6 = arith.constant 0 : index
    %c0_7 = arith.constant 0 : index
    %c0_8 = arith.constant 0 : index
    %21 = vector.load %arg2[%c0_6, %c0_7, %c0_8] : memref<3x64x128xf32, #tpu.memory_space<vmem>>, vector<1x64x128xf32>
    %22 = vector.shape_cast %21 : vector<1x64x128xf32> to vector<64x128xf32>
    %cst_9 = arith.constant dense<0.000000e+00> : vector<32x128xf32>
    %23 = tpu.matmul %0, %22, %cst_9 {dimension_numbers = #tpu.dot_dimension_numbers<[1], [0], [0], [1], [0, 0, 1, 1], [], []>} : vector<32x64xf32>, vector<64x128xf32>, vector<32x128xf32> -> vector<32x128xf32>
    %c1_i32_10 = arith.constant 1 : i32
    %24 = tpu.dynamic_rotate %23 by %c1_i32_10 dim 0 : vector<32x128xf32>, i32 -> vector<32x128xf32>
    %c0_i32_11 = arith.constant 0 : i32
    %25 = vector.broadcast %c0_i32_11 : i32 to vector<32x128xi32>
    %26 = arith.cmpi sgt, %20, %25 : vector<32x128xi32>
    %cst_12 = arith.constant 0.000000e+00 : f32
    %27 = vector.broadcast %cst_12 : f32 to vector<32x128xf32>
    %28 = arith.select %26, %24, %27 : vector<32x128xi1>, vector<32x128xf32>
    %29 = arith.addf %3, %28 : vector<32x128xf32>
    %c2 = arith.constant 2 : index
    %c0_13 = arith.constant 0 : index
    %c0_14 = arith.constant 0 : index
    %30 = vector.load %arg2[%c2, %c0_13, %c0_14] : memref<3x64x128xf32, #tpu.memory_space<vmem>>, vector<1x64x128xf32>
    %31 = vector.shape_cast %30 : vector<1x64x128xf32> to vector<64x128xf32>
    %cst_15 = arith.constant dense<0.000000e+00> : vector<32x128xf32>
    %32 = tpu.matmul %0, %31, %cst_15 {dimension_numbers = #tpu.dot_dimension_numbers<[1], [0], [0], [1], [0, 0, 1, 1], [], []>} : vector<32x64xf32>, vector<64x128xf32>, vector<32x128xf32> -> vector<32x128xf32>
    %c31_i32 = arith.constant 31 : i32
    %33 = tpu.dynamic_rotate %32 by %c31_i32 dim 0 : vector<32x128xf32>, i32 -> vector<32x128xf32>
    %c15_i32 = arith.constant 15 : i32
    %34 = vector.broadcast %c15_i32 : i32 to vector<32x128xi32>
    %35 = arith.cmpi slt, %20, %34 : vector<32x128xi32>
    %cst_16 = arith.constant 0.000000e+00 : f32
    %36 = vector.broadcast %cst_16 : f32 to vector<32x128xf32>
    %37 = arith.select %35, %33, %36 : vector<32x128xi1>, vector<32x128xf32>
    %38 = arith.addf %29, %37 : vector<32x128xf32>
    %c0_17 = arith.constant 0 : index
    %c0_18 = arith.constant 0 : index
    %39 = vector.load %arg3[%c0_17, %c0_18] : memref<1x128xf32, #tpu.memory_space<vmem>>, vector<1x128xf32>
    %40 = vector.broadcast %39 : vector<1x128xf32> to vector<32x128xf32>
    %41 = arith.addf %38, %40 : vector<32x128xf32>
    %cst_19 = arith.constant 0.000000e+00 : f32
    %42 = vector.broadcast %cst_19 : f32 to vector<32x128xf32>
    %43 = arith.cmpf ogt, %41, %42 : vector<32x128xf32>
    %cst_20 = arith.constant 1.000000e-01 : f32
    %44 = vector.broadcast %cst_20 : f32 to vector<32x128xf32>
    %45 = arith.mulf %44, %41 : vector<32x128xf32>
    %46 = arith.select %43, %41, %45 : vector<32x128xi1>, vector<32x128xf32>
    %c1_21 = arith.constant 1 : index
    %c0_22 = arith.constant 0 : index
    %c0_23 = arith.constant 0 : index
    %47 = vector.load %arg4[%c1_21, %c0_22, %c0_23] : memref<3x128x128xf32, #tpu.memory_space<vmem>>, vector<1x128x128xf32>
    %48 = vector.shape_cast %47 : vector<1x128x128xf32> to vector<128x128xf32>
    %cst_24 = arith.constant dense<0.000000e+00> : vector<32x128xf32>
    %49 = tpu.matmul %46, %48, %cst_24 {dimension_numbers = #tpu.dot_dimension_numbers<[1], [0], [0], [1], [0, 0, 1, 1], [], []>} : vector<32x128xf32>, vector<128x128xf32>, vector<32x128xf32> -> vector<32x128xf32>
    %50 = tpu.iota {dimensions = array<i32: 0>} : vector<32x128xi32>
    %c16_i32_25 = arith.constant 16 : i32
    %c0_i32_26 = arith.constant 0 : i32
    %51 = arith.cmpi eq, %c16_i32_25, %c0_i32_26 : i32
    %c1_i32_27 = arith.constant 1 : i32
    %52 = arith.select %51, %c1_i32_27, %c16_i32_25 : i32
    %53 = vector.broadcast %52 : i32 to vector<32x128xi32>
    %54 = arith.remsi %50, %53 : vector<32x128xi32>
    %c0_i32_28 = arith.constant 0 : i32
    %55 = vector.broadcast %c0_i32_28 : i32 to vector<32x128xi32>
    %56 = arith.cmpi ne, %54, %55 : vector<32x128xi32>
    %c0_i32_29 = arith.constant 0 : i32
    %57 = vector.broadcast %c0_i32_29 : i32 to vector<32x128xi32>
    %58 = arith.cmpi slt, %54, %57 : vector<32x128xi32>
    %c0_i32_30 = arith.constant 0 : i32
    %59 = arith.cmpi slt, %52, %c0_i32_30 : i32
    %60 = vector.broadcast %59 : i1 to vector<32x128xi1>
    %61 = vector.broadcast %60 : vector<32x128xi1> to vector<32x128xi1>
    %62 = arith.xori %58, %61 : vector<32x128xi1>
    %63 = arith.andi %62, %56 : vector<32x128xi1>
    %64 = vector.broadcast %52 : i32 to vector<32x128xi32>
    %65 = arith.addi %54, %64 : vector<32x128xi32>
    %66 = arith.select %63, %65, %54 : vector<32x128xi1>, vector<32x128xi32>
    %c0_31 = arith.constant 0 : index
    %c0_32 = arith.constant 0 : index
    %c0_33 = arith.constant 0 : index
    %67 = vector.load %arg4[%c0_31, %c0_32, %c0_33] : memref<3x128x128xf32, #tpu.memory_space<vmem>>, vector<1x128x128xf32>
    %68 = vector.shape_cast %67 : vector<1x128x128xf32> to vector<128x128xf32>
    %cst_34 = arith.constant dense<0.000000e+00> : vector<32x128xf32>
    %69 = tpu.matmul %46, %68, %cst_34 {dimension_numbers = #tpu.dot_dimension_numbers<[1], [0], [0], [1], [0, 0, 1, 1], [], []>} : vector<32x128xf32>, vector<128x128xf32>, vector<32x128xf32> -> vector<32x128xf32>
    %c1_i32_35 = arith.constant 1 : i32
    %70 = tpu.dynamic_rotate %69 by %c1_i32_35 dim 0 : vector<32x128xf32>, i32 -> vector<32x128xf32>
    %c0_i32_36 = arith.constant 0 : i32
    %71 = vector.broadcast %c0_i32_36 : i32 to vector<32x128xi32>
    %72 = arith.cmpi sgt, %66, %71 : vector<32x128xi32>
    %cst_37 = arith.constant 0.000000e+00 : f32
    %73 = vector.broadcast %cst_37 : f32 to vector<32x128xf32>
    %74 = arith.select %72, %70, %73 : vector<32x128xi1>, vector<32x128xf32>
    %75 = arith.addf %49, %74 : vector<32x128xf32>
    %c2_38 = arith.constant 2 : index
    %c0_39 = arith.constant 0 : index
    %c0_40 = arith.constant 0 : index
    %76 = vector.load %arg4[%c2_38, %c0_39, %c0_40] : memref<3x128x128xf32, #tpu.memory_space<vmem>>, vector<1x128x128xf32>
    %77 = vector.shape_cast %76 : vector<1x128x128xf32> to vector<128x128xf32>
    %cst_41 = arith.constant dense<0.000000e+00> : vector<32x128xf32>
    %78 = tpu.matmul %46, %77, %cst_41 {dimension_numbers = #tpu.dot_dimension_numbers<[1], [0], [0], [1], [0, 0, 1, 1], [], []>} : vector<32x128xf32>, vector<128x128xf32>, vector<32x128xf32> -> vector<32x128xf32>
    %c31_i32_42 = arith.constant 31 : i32
    %79 = tpu.dynamic_rotate %78 by %c31_i32_42 dim 0 : vector<32x128xf32>, i32 -> vector<32x128xf32>
    %c15_i32_43 = arith.constant 15 : i32
    %80 = vector.broadcast %c15_i32_43 : i32 to vector<32x128xi32>
    %81 = arith.cmpi slt, %66, %80 : vector<32x128xi32>
    %cst_44 = arith.constant 0.000000e+00 : f32
    %82 = vector.broadcast %cst_44 : f32 to vector<32x128xf32>
    %83 = arith.select %81, %79, %82 : vector<32x128xi1>, vector<32x128xf32>
    %84 = arith.addf %75, %83 : vector<32x128xf32>
    %c0_45 = arith.constant 0 : index
    %c0_46 = arith.constant 0 : index
    %85 = vector.load %arg5[%c0_45, %c0_46] : memref<1x128xf32, #tpu.memory_space<vmem>>, vector<1x128xf32>
    %86 = vector.broadcast %85 : vector<1x128xf32> to vector<32x128xf32>
    %87 = arith.addf %84, %86 : vector<32x128xf32>
    %cst_47 = arith.constant 0.000000e+00 : f32
    %88 = vector.broadcast %cst_47 : f32 to vector<32x128xf32>
    %89 = arith.cmpf ogt, %87, %88 : vector<32x128xf32>
    %cst_48 = arith.constant 1.000000e-01 : f32
    %90 = vector.broadcast %cst_48 : f32 to vector<32x128xf32>
    %91 = arith.mulf %90, %87 : vector<32x128xf32>
    %92 = arith.select %89, %87, %91 : vector<32x128xi1>, vector<32x128xf32>
    %c1_49 = arith.constant 1 : index
    %c0_50 = arith.constant 0 : index
    %c0_51 = arith.constant 0 : index
    %93 = vector.load %arg6[%c1_49, %c0_50, %c0_51] : memref<3x128x64xf32, #tpu.memory_space<vmem>>, vector<1x128x64xf32>
    %94 = vector.shape_cast %93 : vector<1x128x64xf32> to vector<128x64xf32>
    %cst_52 = arith.constant dense<0.000000e+00> : vector<32x64xf32>
    %95 = tpu.matmul %92, %94, %cst_52 {dimension_numbers = #tpu.dot_dimension_numbers<[1], [0], [0], [1], [0, 0, 1, 1], [], []>} : vector<32x128xf32>, vector<128x64xf32>, vector<32x64xf32> -> vector<32x64xf32>
    %96 = tpu.iota {dimensions = array<i32: 0>} : vector<32x64xi32>
    %c16_i32_53 = arith.constant 16 : i32
    %c0_i32_54 = arith.constant 0 : i32
    %97 = arith.cmpi eq, %c16_i32_53, %c0_i32_54 : i32
    %c1_i32_55 = arith.constant 1 : i32
    %98 = arith.select %97, %c1_i32_55, %c16_i32_53 : i32
    %99 = vector.broadcast %98 : i32 to vector<32x64xi32>
    %100 = arith.remsi %96, %99 : vector<32x64xi32>
    %c0_i32_56 = arith.constant 0 : i32
    %101 = vector.broadcast %c0_i32_56 : i32 to vector<32x64xi32>
    %102 = arith.cmpi ne, %100, %101 : vector<32x64xi32>
    %c0_i32_57 = arith.constant 0 : i32
    %103 = vector.broadcast %c0_i32_57 : i32 to vector<32x64xi32>
    %104 = arith.cmpi slt, %100, %103 : vector<32x64xi32>
    %c0_i32_58 = arith.constant 0 : i32
    %105 = arith.cmpi slt, %98, %c0_i32_58 : i32
    %106 = vector.broadcast %105 : i1 to vector<32x64xi1>
    %107 = vector.broadcast %106 : vector<32x64xi1> to vector<32x64xi1>
    %108 = arith.xori %104, %107 : vector<32x64xi1>
    %109 = arith.andi %108, %102 : vector<32x64xi1>
    %110 = vector.broadcast %98 : i32 to vector<32x64xi32>
    %111 = arith.addi %100, %110 : vector<32x64xi32>
    %112 = arith.select %109, %111, %100 : vector<32x64xi1>, vector<32x64xi32>
    %c0_59 = arith.constant 0 : index
    %c0_60 = arith.constant 0 : index
    %c0_61 = arith.constant 0 : index
    %113 = vector.load %arg6[%c0_59, %c0_60, %c0_61] : memref<3x128x64xf32, #tpu.memory_space<vmem>>, vector<1x128x64xf32>
    %114 = vector.shape_cast %113 : vector<1x128x64xf32> to vector<128x64xf32>
    %cst_62 = arith.constant dense<0.000000e+00> : vector<32x64xf32>
    %115 = tpu.matmul %92, %114, %cst_62 {dimension_numbers = #tpu.dot_dimension_numbers<[1], [0], [0], [1], [0, 0, 1, 1], [], []>} : vector<32x128xf32>, vector<128x64xf32>, vector<32x64xf32> -> vector<32x64xf32>
    %c1_i32_63 = arith.constant 1 : i32
    %116 = tpu.dynamic_rotate %115 by %c1_i32_63 dim 0 : vector<32x64xf32>, i32 -> vector<32x64xf32>
    %c0_i32_64 = arith.constant 0 : i32
    %117 = vector.broadcast %c0_i32_64 : i32 to vector<32x64xi32>
    %118 = arith.cmpi sgt, %112, %117 : vector<32x64xi32>
    %cst_65 = arith.constant 0.000000e+00 : f32
    %119 = vector.broadcast %cst_65 : f32 to vector<32x64xf32>
    %120 = arith.select %118, %116, %119 : vector<32x64xi1>, vector<32x64xf32>
    %121 = arith.addf %95, %120 : vector<32x64xf32>
    %c2_66 = arith.constant 2 : index
    %c0_67 = arith.constant 0 : index
    %c0_68 = arith.constant 0 : index
    %122 = vector.load %arg6[%c2_66, %c0_67, %c0_68] : memref<3x128x64xf32, #tpu.memory_space<vmem>>, vector<1x128x64xf32>
    %123 = vector.shape_cast %122 : vector<1x128x64xf32> to vector<128x64xf32>
    %cst_69 = arith.constant dense<0.000000e+00> : vector<32x64xf32>
    %124 = tpu.matmul %92, %123, %cst_69 {dimension_numbers = #tpu.dot_dimension_numbers<[1], [0], [0], [1], [0, 0, 1, 1], [], []>} : vector<32x128xf32>, vector<128x64xf32>, vector<32x64xf32> -> vector<32x64xf32>
    %c31_i32_70 = arith.constant 31 : i32
    %125 = tpu.dynamic_rotate %124 by %c31_i32_70 dim 0 : vector<32x64xf32>, i32 -> vector<32x64xf32>
    %c15_i32_71 = arith.constant 15 : i32
    %126 = vector.broadcast %c15_i32_71 : i32 to vector<32x64xi32>
    %127 = arith.cmpi slt, %112, %126 : vector<32x64xi32>
    %cst_72 = arith.constant 0.000000e+00 : f32
    %128 = vector.broadcast %cst_72 : f32 to vector<32x64xf32>
    %129 = arith.select %127, %125, %128 : vector<32x64xi1>, vector<32x64xf32>
    %130 = arith.addf %121, %129 : vector<32x64xf32>
    %c0_73 = arith.constant 0 : index
    %c0_74 = arith.constant 0 : index
    %131 = vector.load %arg7[%c0_73, %c0_74] : memref<1x64xf32, #tpu.memory_space<vmem>>, vector<1x64xf32>
    %132 = vector.broadcast %131 : vector<1x64xf32> to vector<32x64xf32>
    %133 = arith.addf %130, %132 : vector<32x64xf32>
    %c0_75 = arith.constant 0 : index
    %c0_76 = arith.constant 0 : index
    %134 = vector.load %arg8[%c0_75, %c0_76] : memref<32x64xf32, #tpu.memory_space<vmem>>, vector<32x64xf32>
    tpu.vector_store %arg8[%c0_75, %c0_76], %133 {strides = array<i32>} : memref<32x64xf32, #tpu.memory_space<vmem>>, vector<32x64xf32>,
    return
  }
  func.func @transform_0(%arg0: i32) -> (i32, i32) {
    %c0_i32 = arith.constant 0 : i32
    %c0_i32_0 = arith.constant 0 : i32
    %c0_i32_1 = arith.constant 0 : i32
    return %c0_i32, %c0_i32_0 : i32, i32
  }
  func.func @transform_1(%arg0: i32) -> (i32, i32, i32) {
    %c0_i32 = arith.constant 0 : i32
    %c0_i32_0 = arith.constant 0 : i32
    %c0_i32_1 = arith.constant 0 : i32
    %c0_i32_2 = arith.constant 0 : i32
    return %c0_i32, %c0_i32_0, %c0_i32_1 : i32, i32, i32
  }
  func.func @transform_2(%arg0: i32) -> (i32, i32) {
    %c0_i32 = arith.constant 0 : i32
    %c0_i32_0 = arith.constant 0 : i32
    %c0_i32_1 = arith.constant 0 : i32
    return %c0_i32, %c0_i32_0 : i32, i32
  }
  func.func @transform_3(%arg0: i32) -> (i32, i32, i32) {
    %c0_i32 = arith.constant 0 : i32
    %c0_i32_0 = arith.constant 0 : i32
    %c0_i32_1 = arith.constant 0 : i32
    %c0_i32_2 = arith.constant 0 : i32
    return %c0_i32, %c0_i32_0, %c0_i32_1 : i32, i32, i32
  }
  func.func @transform_4(%arg0: i32) -> (i32, i32) {
    %c0_i32 = arith.constant 0 : i32
    %c0_i32_0 = arith.constant 0 : i32
    %c0_i32_1 = arith.constant 0 : i32
    return %c0_i32, %c0_i32_0 : i32, i32
  }
  func.func @transform_5(%arg0: i32) -> (i32, i32, i32) {
    %c0_i32 = arith.constant 0 : i32
    %c0_i32_0 = arith.constant 0 : i32
    %c0_i32_1 = arith.constant 0 : i32
    %c0_i32_2 = arith.constant 0 : i32
    return %c0_i32, %c0_i32_0, %c0_i32_1 : i32, i32, i32
  }
  func.func @transform_6(%arg0: i32) -> (i32, i32) {
    %c0_i32 = arith.constant 0 : i32
    %c0_i32_0 = arith.constant 0 : i32
    %c0_i32_1 = arith.constant 0 : i32
    return %c0_i32, %c0_i32_0 : i32, i32
  }
  func.func @transform_7(%arg0: i32) -> (i32, i32) {
    %c0_i32 = arith.constant 0 : i32
    %c0_i32_0 = arith.constant 0 : i32
    %c0_i32_1 = arith.constant 0 : i32
    return %c0_i32, %c0_i32_0 : i32, i32
  }
}

</mosaic_0001>

<llo_original>
// kernel: mynn_forward.1
$region0: #{mynn_forward.1}
  #allocation0 [shape = 'u32[]', space=smem, size = 0x4, offset = 0x4, fixed_abs, tag = 'smem constant byte address 0x4 - core index']
  #allocation1 [shape = 'u32[144,128]{1,0:T(1,128)}', space=vmem, size = 0x12000, scoped, tag = 'internal scratch']
  %s0 = inlined_call_operand.vmem [shape: f32[32,64], index: 0, kind: input, shape index: {}]
  %s1 = inlined_call_operand.vmem [shape: f32[3,64,128], index: 1, kind: input, shape index: {}]
  %s2 = inlined_call_operand.vmem [shape: f32[1,128], index: 2, kind: input, shape index: {}]
  %s3 = inlined_call_operand.vmem [shape: f32[3,128,128], index: 3, kind: input, shape index: {}]
  %s4 = inlined_call_operand.vmem [shape: f32[1,128], index: 4, kind: input, shape index: {}]
  %s5 = inlined_call_operand.vmem [shape: f32[3,128,64], index: 5, kind: input, shape index: {}]
  %s6 = inlined_call_operand.vmem [shape: f32[1,64], index: 6, kind: input, shape index: {}]
  %s7 = inlined_call_operand.vmem [shape: f32[32,64], index: 7, kind: output, shape index: {}]
  %s8 = sld [smem:[#allocation0]]
  $region38: #{mynn_forward.1} parent=0
    _
  %s10 = ssub.s32 1, %s8
  %s11 = scalar_select 0, %s10, %s8
  // Predicated region
  $region2: #{mynn_forward.1} parent=0 // pred_check
    _
  $region3: #{mynn_forward.1} parent=0 // pred_check_branch
    %13 = sbr.rel (0) target = $region5
  $region4: #{mynn_forward.1} parent=0 // pred_region
    _
  $region5: #{mynn_forward.1} parent=0 // pred_fallthru
    _
  // Predicated region
  $region6: #{mynn_forward.1} parent=0 // pred_check
    _
  $region7: #{mynn_forward.1} parent=0 // pred_check_branch
    %15 = sbr.rel (0) target = $region9
  $region8: #{mynn_forward.1} parent=0 // pred_region
    _
  $region9: #{mynn_forward.1} parent=0 // pred_fallthru
    _
  // Predicated region
  $region10: #{mynn_forward.1} parent=0 // pred_check
    _
  $region11: #{mynn_forward.1} parent=0 // pred_check_branch
    %17 = sbr.rel (0) target = $region13
  $region12: #{mynn_forward.1} parent=0 // pred_region
    _
  $region13: #{mynn_forward.1} parent=0 // pred_fallthru
    _
  // Predicated region
  $region14: #{mynn_forward.1} parent=0 // pred_check
    _
  $region15: #{mynn_forward.1} parent=0 // pred_check_branch
    %19 = sbr.rel (0) target = $region17
  $region16: #{mynn_forward.1} parent=0 // pred_region
    _
  $region17: #{mynn_forward.1} parent=0 // pred_fallthru
    _
  // Predicated region
  $region18: #{mynn_forward.1} parent=0 // pred_check
    _
  $region19: #{mynn_forward.1} parent=0 // pred_check_branch
    %21 = sbr.rel (0) target = $region21
  $region20: #{mynn_forward.1} parent=0 // pred_region
    _
  $region21: #{mynn_forward.1} parent=0 // pred_fallthru
    _
  // Predicated region
  $region22: #{mynn_forward.1} parent=0 // pred_check
    _
  $region23: #{mynn_forward.1} parent=0 // pred_check_branch
    %23 = sbr.rel (0) target = $region25
  $region24: #{mynn_forward.1} parent=0 // pred_region
    _
  $region25: #{mynn_forward.1} parent=0 // pred_fallthru
    _
  // Predicated region
  $region26: #{mynn_forward.1} parent=0 // pred_check
    _
  $region27: #{mynn_forward.1} parent=0 // pred_check_branch
    %25 = sbr.rel (0) target = $region29
  $region28: #{mynn_forward.1} parent=0 // pred_region
    _
  $region29: #{mynn_forward.1} parent=0 // pred_fallthru
    _
  %v26 = vld [vmem:[%s0] sm:$0xff]
  %v27 = vld [vmem:[%s0 + $0x8] sm:$0xff]
  %v28 = vld [vmem:[%s0 + $0x10] sm:$0xff]
  %v29 = vld [vmem:[%s0 + $0x18] sm:$0xff]
  %s30 = scalar_lea.vmem %s1, 64
  %v31 = vld [vmem:[%s30] sm:$0xff]
  %v32 = vld [vmem:[%s30 + $0x8] sm:$0xff]
  %v33 = vld [vmem:[%s30 + $0x10] sm:$0xff]
  %v34 = vld [vmem:[%s30 + $0x18] sm:$0xff]
  %v35 = vld [vmem:[%s30 + $0x20] sm:$0xff]
  %v36 = vld [vmem:[%s30 + $0x28] sm:$0xff]
  %v37 = vld [vmem:[%s30 + $0x30] sm:$0xff]
  %v38 = vld [vmem:[%s30 + $0x38] sm:$0xff]
  %v39 = vlaneseq
  %v40 = vshrl.u32 %v39, 7
  %v41 = vadd.s32 %v40, 8
  %v42 = vadd.s32 %v40, 16
  %v43 = vadd.s32 %v40, 24
  %vm44 = vcmp.lt.s32.totalorder %v40, 0
  %v45 = vsub.s32 0, %v40
  %v46 = vsel %vm44, %v45, %v40
  %v47 = vshrl.u32 %v46, 4
  %v48 = vand.u32 %v46, 15
  %v49 = vsub.s32 0, %v48
  %v50 = vsel %vm44, %v49, %v48
  %vm51 = vcmp.lt.s32.totalorder %v41, 0
  %v52 = vsub.s32 0, %v41
  %v53 = vsel %vm51, %v52, %v41
  %v54 = vshrl.u32 %v53, 4
  %v55 = vand.u32 %v53, 15
  %v56 = vsub.s32 0, %v55
  %v57 = vsel %vm51, %v56, %v55
  %vm58 = vcmp.lt.s32.totalorder %v42, 0
  %v59 = vsub.s32 0, %v42
  %v60 = vsel %vm58, %v59, %v42
  %v61 = vshrl.u32 %v60, 4
  %v62 = vand.u32 %v60, 15
  %v63 = vsub.s32 0, %v62
  %v64 = vsel %vm58, %v63, %v62
  %vm65 = vcmp.lt.s32.totalorder %v43, 0
  %v66 = vsub.s32 0, %v43
  %v67 = vsel %vm65, %v66, %v43
  %v68 = vshrl.u32 %v67, 4
  %v69 = vand.u32 %v67, 15
  %v70 = vsub.s32 0, %v69
  %v71 = vsel %vm65, %v70, %v69
  %vm72 = vcmp.ne.s32.totalorder %v50, 0
  %vm73 = vcmp.ne.s32.totalorder %v57, 0
  %vm74 = vcmp.ne.s32.totalorder %v64, 0
  %vm75 = vcmp.ne.s32.totalorder %v71, 0
  %vm76 = vcmp.lt.s32.totalorder %v50, 0
  %vm77 = vcmp.lt.s32.totalorder %v57, 0
  %vm78 = vcmp.lt.s32.totalorder %v64, 0
  %vm79 = vcmp.lt.s32.totalorder %v71, 0
  %vm80 = vmand %vm76, %vm72
  %vm81 = vmand %vm77, %vm73
  %vm82 = vmand %vm78, %vm74
  %vm83 = vmand %vm79, %vm75
  %v84 = vadd.s32 %v50, 16
  %v85 = vadd.s32 %v57, 16
  %v86 = vadd.s32 %v64, 16
  %v87 = vadd.s32 %v71, 16
  %v88 = vsel %vm80, %v84, %v50
  %v89 = vsel %vm81, %v85, %v57
  %v90 = vsel %vm82, %v86, %v64
  %v91 = vsel %vm83, %v87, %v71
  %v92 = vld [vmem:[%s1] sm:$0xff]
  %v93 = vld [vmem:[%s1 + $0x8] sm:$0xff]
  %v94 = vld [vmem:[%s1 + $0x10] sm:$0xff]
  %v95 = vld [vmem:[%s1 + $0x18] sm:$0xff]
  %v96 = vld [vmem:[%s1 + $0x20] sm:$0xff]
  %v97 = vld [vmem:[%s1 + $0x28] sm:$0xff]
  %v98 = vld [vmem:[%s1 + $0x30] sm:$0xff]
  %v99 = vld [vmem:[%s1 + $0x38] sm:$0xff]
  %vm100 = vcmask 523264
  %v102 = vsel %vm100, %v26, 0
  %v105 = vsel %vm100, %v27, 0
  %v108 = vsel %vm100, %v28, 0
  %v111 = vsel %vm100, %v29, 0
  %113 = vmatprep.subr.mxu0 0.0
  %114 = vmatpush1.msra.mxu0 %v92
  %115 = vmatprep.subr.mxu0 0.0
  %116 = vmatpush1.msra.mxu0 %v93
  %117 = vmatprep.subr.mxu0 0.0
  %118 = vmatpush1.msra.mxu0 %v94
  %119 = vmatprep.subr.mxu0 0.0
  %120 = vmatpush1.msra.mxu0 %v95
  %121 = vmatprep.subr.mxu0 0.0
  %122 = vmatpush1.msra.mxu0 %v96
  %123 = vmatprep.subr.mxu0 0.0
  %124 = vmatpush1.msra.mxu0 %v97
  %125 = vmatprep.subr.mxu0 0.0
  %126 = vmatpush1.msra.mxu0 %v98
  %127 = vmatprep.subr.mxu0 0.0
  %128 = vmatpush1.msra.mxu0 %v99
  %129 = vmatprep.subr.mxu0 0.0
  %130 = vmatpush1.msra.mxu0 0.0
  %131 = vmatprep.subr.mxu0 0.0
  %132 = vmatpush1.msra.mxu0 0.0
  %133 = vmatprep.subr.mxu0 0.0
  %134 = vmatpush1.msra.mxu0 0.0
  %135 = vmatprep.subr.mxu0 0.0
  %136 = vmatpush1.msra.mxu0 0.0
  %137 = vmatprep.subr.mxu0 0.0
  %138 = vmatpush1.msra.mxu0 0.0
  %139 = vmatprep.subr.mxu0 0.0
  %140 = vmatpush1.msra.mxu0 0.0
  %141 = vmatprep.subr.mxu0 0.0
  %142 = vmatpush1.msra.mxu0 0.0
  %143 = vmatprep.subr.mxu0 0.0
  %144 = vmatpush1.msra.mxu0 0.0
  %145 = vmatprep.subr.mxu0 0.0
  %146 = vmatpush1.msra.mxu0 0.0
  %147 = vmatprep.subr.mxu0 0.0
  %148 = vmatpush1.msra.mxu0 0.0
  %149 = vmatprep.subr.mxu0 0.0
  %150 = vmatpush1.msra.mxu0 0.0
  %151 = vmatprep.subr.mxu0 0.0
  %152 = vmatpush1.msra.mxu0 0.0
  %153 = vmatprep.subr.mxu0 0.0
  %154 = vmatpush1.msra.mxu0 0.0
  %155 = vmatprep.subr.mxu0 0.0
  %156 = vmatpush1.msra.mxu0 0.0
  %157 = vmatprep.subr.mxu0 0.0
  %158 = vmatpush1.msra.mxu0 0.0
  %159 = vmatprep.subr.mxu0 0.0
  %160 = vmatpush1.msra.mxu0 0.0
  %161 = vmatprep.subr.mxu0 0.0
  %162 = vmatpush1.msra.mxu0 0.0
  %163 = vmatprep.subr.mxu0 0.0
  %164 = vmatpush1.msra.mxu0 0.0
  %165 = vmatprep.subr.mxu0 0.0
  %166 = vmatpush1.msra.mxu0 0.0
  %167 = vmatprep.subr.mxu0 0.0
  %168 = vmatpush1.msra.mxu0 0.0
  %169 = vmatprep.subr.mxu0 0.0
  %170 = vmatpush1.msra.mxu0 0.0
  %171 = vmatprep.subr.mxu0 0.0
  %172 = vmatpush1.msra.mxu0 0.0
  %173 = vmatprep.subr.mxu0 0.0
  %174 = vmatpush1.msra.mxu0 0.0
  %175 = vmatprep.subr.mxu0 0.0
  %176 = vmatpush1.msra.mxu0 0.0
  %177 = vmatprep.mubr.f32.mxu0 0.0
  %178 = vmatmul.mubr.f32.gmra.mrb[0].mxu0 %v102
  %v179 = vpop.f32.mrb[0].mxu0
  %v180 = vadd.f32 0.0, %v179
  %v181 = vpop.f32.mrb[0].mxu0
  %182 = vmatprep.mubr.f32.mxu0 0.0
  %183 = vmatmul.mubr.f32.gmra.mrb[0].mxu0 %v105
  %v184 = vpop.f32.mrb[0].mxu0
  %v185 = vadd.f32 0.0, %v184
  %v186 = vpop.f32.mrb[0].mxu0
  %187 = vmatprep.mubr.f32.mxu0 0.0
  %188 = vmatmul.mubr.f32.gmra.mrb[0].mxu0 %v108
  %v189 = vpop.f32.mrb[0].mxu0
  %v190 = vadd.f32 0.0, %v189
  %v191 = vpop.f32.mrb[0].mxu0
  %192 = vmatprep.mubr.f32.mxu0 0.0
  %193 = vmatmul.mubr.f32.gmra.mrb[0].mxu0 %v111
  %v194 = vpop.f32.mrb[0].mxu0
  %v195 = vadd.f32 0.0, %v194
  %v196 = vpop.f32.mrb[0].mxu0
  %197 = vdwg.mxu0
  %v198 = vrot.slane %v180, 7
  %v199 = vrot.slane %v185, 7
  %v200 = vrot.slane %v190, 7
  %v201 = vrot.slane %v195, 7
  %vm202 = vcmp.lt.s32.totalorder %v40, 1
  %v203 = vsel %vm202, %v200, %v201
  %v204 = vsel %vm202, %v199, %v200
  %v205 = vsel %vm202, %v198, %v199
  %v206 = vsel %vm202, %v201, %v198
  %vm207 = vcmp.gt.s32.totalorder %v88, 0
  %vm208 = vcmp.gt.s32.totalorder %v89, 0
  %vm209 = vcmp.gt.s32.totalorder %v90, 0
  %vm210 = vcmp.gt.s32.totalorder %v91, 0
  %v211 = vsel %vm207, %v206, 0.0
  %v212 = vsel %vm208, %v205, 0.0
  %v213 = vsel %vm209, %v204, 0.0
  %v214 = vsel %vm210, %v203, 0.0
  %215 = vmatprep.subr.mxu0 0.0
  %216 = vmatpush1.msra.mxu0 %v31
  %217 = vmatprep.subr.mxu0 0.0
  %218 = vmatpush1.msra.mxu0 %v32
  %219 = vmatprep.subr.mxu0 0.0
  %220 = vmatpush1.msra.mxu0 %v33
  %221 = vmatprep.subr.mxu0 0.0
  %222 = vmatpush1.msra.mxu0 %v34
  %223 = vmatprep.subr.mxu0 0.0
  %224 = vmatpush1.msra.mxu0 %v35
  %225 = vmatprep.subr.mxu0 0.0
  %226 = vmatpush1.msra.mxu0 %v36
  %227 = vmatprep.subr.mxu0 0.0
  %228 = vmatpush1.msra.mxu0 %v37
  %229 = vmatprep.subr.mxu0 0.0
  %230 = vmatpush1.msra.mxu0 %v38
  %231 = vmatprep.subr.mxu0 0.0
  %232 = vmatpush1.msra.mxu0 0.0
  %233 = vmatprep.subr.mxu0 0.0
  %234 = vmatpush1.msra.mxu0 0.0
  %235 = vmatprep.subr.mxu0 0.0
  %236 = vmatpush1.msra.mxu0 0.0
  %237 = vmatprep.subr.mxu0 0.0
  %238 = vmatpush1.msra.mxu0 0.0
  %239 = vmatprep.subr.mxu0 0.0
  %240 = vmatpush1.msra.mxu0 0.0
  %241 = vmatprep.subr.mxu0 0.0
  %242 = vmatpush1.msra.mxu0 0.0
  %243 = vmatprep.subr.mxu0 0.0
  %244 = vmatpush1.msra.mxu0 0.0
  %245 = vmatprep.subr.mxu0 0.0
  %246 = vmatpush1.msra.mxu0 0.0
  %247 = vmatprep.subr.mxu0 0.0
  %248 = vmatpush1.msra.mxu0 0.0
  %249 = vmatprep.subr.mxu0 0.0
  %250 = vmatpush1.msra.mxu0 0.0
  %251 = vmatprep.subr.mxu0 0.0
  %252 = vmatpush1.msra.mxu0 0.0
  %253 = vmatprep.subr.mxu0 0.0
  %254 = vmatpush1.msra.mxu0 0.0
  %255 = vmatprep.subr.mxu0 0.0
  %256 = vmatpush1.msra.mxu0 0.0
  %257 = vmatprep.subr.mxu0 0.0
  %258 = vmatpush1.msra.mxu0 0.0
  %259 = vmatprep.subr.mxu0 0.0
  %260 = vmatpush1.msra.mxu0 0.0
  %261 = vmatprep.subr.mxu0 0.0
  %262 = vmatpush1.msra.mxu0 0.0
  %263 = vmatprep.subr.mxu0 0.0
  %264 = vmatpush1.msra.mxu0 0.0
  %265 = vmatprep.subr.mxu0 0.0
  %266 = vmatpush1.msra.mxu0 0.0
  %267 = vmatprep.subr.mxu0 0.0
  %268 = vmatpush1.msra.mxu0 0.0
  %269 = vmatprep.subr.mxu0 0.0
  %270 = vmatpush1.msra.mxu0 0.0
  %271 = vmatprep.subr.mxu0 0.0
  %272 = vmatpush1.msra.mxu0 0.0
  %273 = vmatprep.subr.mxu0 0.0
  %274 = vmatpush1.msra.mxu0 0.0
  %275 = vmatprep.subr.mxu0 0.0
  %276 = vmatpush1.msra.mxu0 0.0
  %277 = vmatprep.subr.mxu0 0.0
  %278 = vmatpush1.msra.mxu0 0.0
  %279 = vmatprep.mubr.f32.mxu0 0.0
  %280 = vmatmul.mubr.f32.gmra.mrb[0].mxu0 %v102
  %v281 = vpop.f32.mrb[0].mxu0
  %v282 = vadd.f32 %v211, %v281
  %v283 = vpop.f32.mrb[0].mxu0
  %284 = vmatprep.mubr.f32.mxu0 0.0
  %285 = vmatmul.mubr.f32.gmra.mrb[0].mxu0 %v105
  %v286 = vpop.f32.mrb[0].mxu0
  %v287 = vadd.f32 %v212, %v286
  %v288 = vpop.f32.mrb[0].mxu0
  %289 = vmatprep.mubr.f32.mxu0 0.0
  %290 = vmatmul.mubr.f32.gmra.mrb[0].mxu0 %v108
  %v291 = vpop.f32.mrb[0].mxu0
  %v292 = vadd.f32 %v213, %v291
  %v293 = vpop.f32.mrb[0].mxu0
  %294 = vmatprep.mubr.f32.mxu0 0.0
  %295 = vmatmul.mubr.f32.gmra.mrb[0].mxu0 %v111
  %v296 = vpop.f32.mrb[0].mxu0
  %v297 = vadd.f32 %v214, %v296
  %v298 = vpop.f32.mrb[0].mxu0
  %299 = vdwg.mxu0
  %s300 = scalar_lea.vmem %s1, 128
  %v301 = vld [vmem:[%s300] sm:$0xff]
  %v302 = vld [vmem:[%s300 + $0x8] sm:$0xff]
  %v303 = vld [vmem:[%s300 + $0x10] sm:$0xff]
  %v304 = vld [vmem:[%s300 + $0x18] sm:$0xff]
  %v305 = vld [vmem:[%s300 + $0x20] sm:$0xff]
  %v306 = vld [vmem:[%s300 + $0x28] sm:$0xff]
  %v307 = vld [vmem:[%s300 + $0x30] sm:$0xff]
  %v308 = vld [vmem:[%s300 + $0x38] sm:$0xff]
  %309 = vmatprep.subr.mxu0 0.0
  %310 = vmatpush1.msra.mxu0 %v301
  %311 = vmatprep.subr.mxu0 0.0
  %312 = vmatpush1.msra.mxu0 %v302
  %313 = vmatprep.subr.mxu0 0.0
  %314 = vmatpush1.msra.mxu0 %v303
  %315 = vmatprep.subr.mxu0 0.0
  %316 = vmatpush1.msra.mxu0 %v304
  %317 = vmatprep.subr.mxu0 0.0
  %318 = vmatpush1.msra.mxu0 %v305
  %319 = vmatprep.subr.mxu0 0.0
  %320 = vmatpush1.msra.mxu0 %v306
  %321 = vmatprep.subr.mxu0 0.0
  %322 = vmatpush1.msra.mxu0 %v307
  %323 = vmatprep.subr.mxu0 0.0
  %324 = vmatpush1.msra.mxu0 %v308
  %325 = vmatprep.subr.mxu0 0.0
  %326 = vmatpush1.msra.mxu0 0.0
  %327 = vmatprep.subr.mxu0 0.0
  %328 = vmatpush1.msra.mxu0 0.0
  %329 = vmatprep.subr.mxu0 0.0
  %330 = vmatpush1.msra.mxu0 0.0
  %331 = vmatprep.subr.mxu0 0.0
  %332 = vmatpush1.msra.mxu0 0.0
  %333 = vmatprep.subr.mxu0 0.0
  %334 = vmatpush1.msra.mxu0 0.0
  %335 = vmatprep.subr.mxu0 0.0
  %336 = vmatpush1.msra.mxu0 0.0
  %337 = vmatprep.subr.mxu0 0.0
  %338 = vmatpush1.msra.mxu0 0.0
  %339 = vmatprep.subr.mxu0 0.0
  %340 = vmatpush1.msra.mxu0 0.0
  %341 = vmatprep.subr.mxu0 0.0
  %342 = vmatpush1.msra.mxu0 0.0
  %343 = vmatprep.subr.mxu0 0.0
  %344 = vmatpush1.msra.mxu0 0.0
  %345 = vmatprep.subr.mxu0 0.0
  %346 = vmatpush1.msra.mxu0 0.0
  %347 = vmatprep.subr.mxu0 0.0
  %348 = vmatpush1.msra.mxu0 0.0
  %349 = vmatprep.subr.mxu0 0.0
  %350 = vmatpush1.msra.mxu0 0.0
  %351 = vmatprep.subr.mxu0 0.0
  %352 = vmatpush1.msra.mxu0 0.0
  %353 = vmatprep.subr.mxu0 0.0
  %354 = vmatpush1.msra.mxu0 0.0
  %355 = vmatprep.subr.mxu0 0.0
  %356 = vmatpush1.msra.mxu0 0.0
  %357 = vmatprep.subr.mxu0 0.0
  %358 = vmatpush1.msra.mxu0 0.0
  %359 = vmatprep.subr.mxu0 0.0
  %360 = vmatpush1.msra.mxu0 0.0
  %361 = vmatprep.subr.mxu0 0.0
  %362 = vmatpush1.msra.mxu0 0.0
  %363 = vmatprep.subr.mxu0 0.0
  %364 = vmatpush1.msra.mxu0 0.0
  %365 = vmatprep.subr.mxu0 0.0
  %366 = vmatpush1.msra.mxu0 0.0
  %367 = vmatprep.subr.mxu0 0.0
  %368 = vmatpush1.msra.mxu0 0.0
  %369 = vmatprep.subr.mxu0 0.0
  %370 = vmatpush1.msra.mxu0 0.0
  %371 = vmatprep.subr.mxu0 0.0
  %372 = vmatpush1.msra.mxu0 0.0
  %373 = vmatprep.mubr.f32.mxu0 0.0
  %374 = vmatmul.mubr.f32.gmra.mrb[0].mxu0 %v102
  %v375 = vpop.f32.mrb[0].mxu0
  %v376 = vadd.f32 0.0, %v375
  %v377 = vpop.f32.mrb[0].mxu0
  %378 = vmatprep.mubr.f32.mxu0 0.0
  %379 = vmatmul.mubr.f32.gmra.mrb[0].mxu0 %v105
  %v380 = vpop.f32.mrb[0].mxu0
  %v381 = vadd.f32 0.0, %v380
  %v382 = vpop.f32.mrb[0].mxu0
  %383 = vmatprep.mubr.f32.mxu0 0.0
  %384 = vmatmul.mubr.f32.gmra.mrb[0].mxu0 %v108
  %v385 = vpop.f32.mrb[0].mxu0
  %v386 = vadd.f32 0.0, %v385
  %v387 = vpop.f32.mrb[0].mxu0
  %388 = vmatprep.mubr.f32.mxu0 0.0
  %389 = vmatmul.mubr.f32.gmra.mrb[0].mxu0 %v111
  %v390 = vpop.f32.mrb[0].mxu0
  %v391 = vadd.f32 0.0, %v390
  %v392 = vpop.f32.mrb[0].mxu0
  %393 = vdwg.mxu0
  %v394 = vrot.slane %v376, 1
  %v395 = vrot.slane %v381, 1
  %v396 = vrot.slane %v386, 1
  %v397 = vrot.slane %v391, 1
  %vm398 = vcmp.lt.s32.totalorder %v40, 7
  %v399 = vsel %vm398, %v396, %v397
  %v400 = vsel %vm398, %v395, %v396
  %v401 = vsel %vm398, %v394, %v395
  %v402 = vsel %vm398, %v397, %v394
  %vm403 = vcmp.lt.s32.totalorder %v88, 15
  %vm404 = vcmp.lt.s32.totalorder %v89, 15
  %vm405 = vcmp.lt.s32.totalorder %v90, 15
  %vm406 = vcmp.lt.s32.totalorder %v91, 15
  %v407 = vsel %vm403, %v401, 0.0
  %v408 = vsel %vm404, %v400, 0.0
  %v409 = vsel %vm405, %v399, 0.0
  %v410 = vsel %vm406, %v402, 0.0
  %v411 = vadd.f32 %v282, %v407
  %v412 = vadd.f32 %v287, %v408
  %v413 = vadd.f32 %v292, %v409
  %v414 = vadd.f32 %v297, %v410
  %v415 = vld [vmem:[%s2] sm:$0x1]
  %v417 = vlaneseq
  %v418 = vshrl.u32 %v417, 7
  %v419 = vsub.s32 0, %v418
  %v420 = vrot.slane %v415, %v419
  %v422 = vadd.f32 %v411, %v420
  %v423 = vadd.f32 %v412, %v420
  %v424 = vadd.f32 %v413, %v420
  %v425 = vadd.f32 %v414, %v420
  %vm426 = vcmp.gt.f32.partialorder %v422, 0.0
  %vm427 = vcmp.gt.f32.partialorder %v423, 0.0
  %vm428 = vcmp.gt.f32.partialorder %v424, 0.0
  %vm429 = vcmp.gt.f32.partialorder %v425, 0.0
  %v430 = vmul.f32 %v422, 0.1
  %v431 = vmul.f32 %v423, 0.1
  %v432 = vmul.f32 %v424, 0.1
  %v433 = vmul.f32 %v425, 0.1
  %v434 = vsel %vm426, %v422, %v430
  %v435 = vsel %vm427, %v423, %v431
  %v436 = vsel %vm428, %v424, %v432
  %v437 = vsel %vm429, %v425, %v433
  %s438 = scalar_lea.vmem %s3, 128
  %v439 = vld [vmem:[%s438] sm:$0xff]
  %v440 = vld [vmem:[%s438 + $0x8] sm:$0xff]
  %v441 = vld [vmem:[%s438 + $0x10] sm:$0xff]
  %v442 = vld [vmem:[%s438 + $0x18] sm:$0xff]
  %v443 = vld [vmem:[%s438 + $0x20] sm:$0xff]
  %v444 = vld [vmem:[%s438 + $0x28] sm:$0xff]
  %v445 = vld [vmem:[%s438 + $0x30] sm:$0xff]
  %v446 = vld [vmem:[%s438 + $0x38] sm:$0xff]
  %v447 = vld [vmem:[%s438 + $0x40] sm:$0xff]
  %v448 = vld [vmem:[%s438 + $0x48] sm:$0xff]
  %v449 = vld [vmem:[%s438 + $0x50] sm:$0xff]
  %v450 = vld [vmem:[%s438 + $0x58] sm:$0xff]
  %v451 = vld [vmem:[%s438 + $0x60] sm:$0xff]
  %v452 = vld [vmem:[%s438 + $0x68] sm:$0xff]
  %v453 = vld [vmem:[%s438 + $0x70] sm:$0xff]
  %v454 = vld [vmem:[%s438 + $0x78] sm:$0xff]
  %v455 = vld [vmem:[%s3] sm:$0xff]
  %v456 = vld [vmem:[%s3 + $0x8] sm:$0xff]
  %v457 = vld [vmem:[%s3 + $0x10] sm:$0xff]
  %v458 = vld [vmem:[%s3 + $0x18] sm:$0xff]
  %v459 = vld [vmem:[%s3 + $0x20] sm:$0xff]
  %v460 = vld [vmem:[%s3 + $0x28] sm:$0xff]
  %v461 = vld [vmem:[%s3 + $0x30] sm:$0xff]
  %v462 = vld [vmem:[%s3 + $0x38] sm:$0xff]
  %v463 = vld [vmem:[%s3 + $0x40] sm:$0xff]
  %v464 = vld [vmem:[%s3 + $0x48] sm:$0xff]
  %v465 = vld [vmem:[%s3 + $0x50] sm:$0xff]
  %v466 = vld [vmem:[%s3 + $0x58] sm:$0xff]
  %v467 = vld [vmem:[%s3 + $0x60] sm:$0xff]
  %v468 = vld [vmem:[%s3 + $0x68] sm:$0xff]
  %v469 = vld [vmem:[%s3 + $0x70] sm:$0xff]
  %v470 = vld [vmem:[%s3 + $0x78] sm:$0xff]
  %471 = vmatprep.subr.mxu0 0.0
  %472 = vmatpush1.msra.mxu0 %v455
  %473 = vmatprep.subr.mxu0 0.0
  %474 = vmatpush1.msra.mxu0 %v456
  %475 = vmatprep.subr.mxu0 0.0
  %476 = vmatpush1.msra.mxu0 %v457
  %477 = vmatprep.subr.mxu0 0.0
  %478 = vmatpush1.msra.mxu0 %v458
  %479 = vmatprep.subr.mxu0 0.0
  %480 = vmatpush1.msra.mxu0 %v459
  %481 = vmatprep.subr.mxu0 0.0
  %482 = vmatpush1.msra.mxu0 %v460
  %483 = vmatprep.subr.mxu0 0.0
  %484 = vmatpush1.msra.mxu0 %v461
  %485 = vmatprep.subr.mxu0 0.0
  %486 = vmatpush1.msra.mxu0 %v462
  %487 = vmatprep.subr.mxu0 0.0
  %488 = vmatpush1.msra.mxu0 %v463
  %489 = vmatprep.subr.mxu0 0.0
  %490 = vmatpush1.msra.mxu0 %v464
  %491 = vmatprep.subr.mxu0 0.0
  %492 = vmatpush1.msra.mxu0 %v465
  %493 = vmatprep.subr.mxu0 0.0
  %494 = vmatpush1.msra.mxu0 %v466
  %495 = vmatprep.subr.mxu0 0.0
  %496 = vmatpush1.msra.mxu0 %v467
  %497 = vmatprep.subr.mxu0 0.0
  %498 = vmatpush1.msra.mxu0 %v468
  %499 = vmatprep.subr.mxu0 0.0
  %500 = vmatpush1.msra.mxu0 %v469
  %501 = vmatprep.subr.mxu0 0.0
  %502 = vmatpush1.msra.mxu0 %v470
  %503 = vmatprep.subr.mxu0 0.0
  %504 = vmatpush1.msra.mxu0 0.0
  %505 = vmatprep.subr.mxu0 0.0
  %506 = vmatpush1.msra.mxu0 0.0
  %507 = vmatprep.subr.mxu0 0.0
  %508 = vmatpush1.msra.mxu0 0.0
  %509 = vmatprep.subr.mxu0 0.0
  %510 = vmatpush1.msra.mxu0 0.0
  %511 = vmatprep.subr.mxu0 0.0
  %512 = vmatpush1.msra.mxu0 0.0
  %513 = vmatprep.subr.mxu0 0.0
  %514 = vmatpush1.msra.mxu0 0.0
  %515 = vmatprep.subr.mxu0 0.0
  %516 = vmatpush1.msra.mxu0 0.0
  %517 = vmatprep.subr.mxu0 0.0
  %518 = vmatpush1.msra.mxu0 0.0
  %519 = vmatprep.subr.mxu0 0.0
  %520 = vmatpush1.msra.mxu0 0.0
  %521 = vmatprep.subr.mxu0 0.0
  %522 = vmatpush1.msra.mxu0 0.0
  %523 = vmatprep.subr.mxu0 0.0
  %524 = vmatpush1.msra.mxu0 0.0
  %525 = vmatprep.subr.mxu0 0.0
  %526 = vmatpush1.msra.mxu0 0.0
  %527 = vmatprep.subr.mxu0 0.0
  %528 = vmatpush1.msra.mxu0 0.0
  %529 = vmatprep.subr.mxu0 0.0
  %530 = vmatpush1.msra.mxu0 0.0
  %531 = vmatprep.subr.mxu0 0.0
  %532 = vmatpush1.msra.mxu0 0.0
  %533 = vmatprep.subr.mxu0 0.0
  %534 = vmatpush1.msra.mxu0 0.0
  %535 = vmatprep.mubr.f32.mxu0 0.0
  %536 = vmatmul.mubr.f32.gmra.mrb[0].mxu0 %v434
  %v537 = vpop.f32.mrb[0].mxu0
  %v538 = vadd.f32 0.0, %v537
  %v539 = vpop.f32.mrb[0].mxu0
  %540 = vmatprep.mubr.f32.mxu0 0.0
  %541 = vmatmul.mubr.f32.gmra.mrb[0].mxu0 %v435
  %v542 = vpop.f32.mrb[0].mxu0
  %v543 = vadd.f32 0.0, %v542
  %v544 = vpop.f32.mrb[0].mxu0
  %545 = vmatprep.mubr.f32.mxu0 0.0
  %546 = vmatmul.mubr.f32.gmra.mrb[0].mxu0 %v436
  %v547 = vpop.f32.mrb[0].mxu0
  %v548 = vadd.f32 0.0, %v547
  %v549 = vpop.f32.mrb[0].mxu0
  %550 = vmatprep.mubr.f32.mxu0 0.0
  %551 = vmatmul.mubr.f32.gmra.mrb[0].mxu0 %v437
  %v552 = vpop.f32.mrb[0].mxu0
  %v553 = vadd.f32 0.0, %v552
  %v554 = vpop.f32.mrb[0].mxu0
  %555 = vdwg.mxu0
  %v556 = vrot.slane %v538, 7
  %v557 = vrot.slane %v543, 7
  %v558 = vrot.slane %v548, 7
  %v559 = vrot.slane %v553, 7
  %v560 = vsel %vm202, %v558, %v559
  %v561 = vsel %vm202, %v557, %v558
  %v562 = vsel %vm202, %v556, %v557
  %v563 = vsel %vm202, %v559, %v556
  %v564 = vsel %vm207, %v563, 0.0
  %v565 = vsel %vm208, %v562, 0.0
  %v566 = vsel %vm209, %v561, 0.0
  %v567 = vsel %vm210, %v560, 0.0
  %568 = vmatprep.subr.mxu0 0.0
  %569 = vmatpush1.msra.mxu0 %v439
  %570 = vmatprep.subr.mxu0 0.0
  %571 = vmatpush1.msra.mxu0 %v440
  %572 = vmatprep.subr.mxu0 0.0
  %573 = vmatpush1.msra.mxu0 %v441
  %574 = vmatprep.subr.mxu0 0.0
  %575 = vmatpush1.msra.mxu0 %v442
  %576 = vmatprep.subr.mxu0 0.0
  %577 = vmatpush1.msra.mxu0 %v443
  %578 = vmatprep.subr.mxu0 0.0
  %579 = vmatpush1.msra.mxu0 %v444
  %580 = vmatprep.subr.mxu0 0.0
  %581 = vmatpush1.msra.mxu0 %v445
  %582 = vmatprep.subr.mxu0 0.0
  %583 = vmatpush1.msra.mxu0 %v446
  %584 = vmatprep.subr.mxu0 0.0
  %585 = vmatpush1.msra.mxu0 %v447
  %586 = vmatprep.subr.mxu0 0.0
  %587 = vmatpush1.msra.mxu0 %v448
  %588 = vmatprep.subr.mxu0 0.0
  %589 = vmatpush1.msra.mxu0 %v449
  %590 = vmatprep.subr.mxu0 0.0
  %591 = vmatpush1.msra.mxu0 %v450
  %592 = vmatprep.subr.mxu0 0.0
  %593 = vmatpush1.msra.mxu0 %v451
  %594 = vmatprep.subr.mxu0 0.0
  %595 = vmatpush1.msra.mxu0 %v452
  %596 = vmatprep.subr.mxu0 0.0
  %597 = vmatpush1.msra.mxu0 %v453
  %598 = vmatprep.subr.mxu0 0.0
  %599 = vmatpush1.msra.mxu0 %v454
  %600 = vmatprep.subr.mxu0 0.0
  %601 = vmatpush1.msra.mxu0 0.0
  %602 = vmatprep.subr.mxu0 0.0
  %603 = vmatpush1.msra.mxu0 0.0
  %604 = vmatprep.subr.mxu0 0.0
  %605 = vmatpush1.msra.mxu0 0.0
  %606 = vmatprep.subr.mxu0 0.0
  %607 = vmatpush1.msra.mxu0 0.0
  %608 = vmatprep.subr.mxu0 0.0
  %609 = vmatpush1.msra.mxu0 0.0
  %610 = vmatprep.subr.mxu0 0.0
  %611 = vmatpush1.msra.mxu0 0.0
  %612 = vmatprep.subr.mxu0 0.0
  %613 = vmatpush1.msra.mxu0 0.0
  %614 = vmatprep.subr.mxu0 0.0
  %615 = vmatpush1.msra.mxu0 0.0
  %616 = vmatprep.subr.mxu0 0.0
  %617 = vmatpush1.msra.mxu0 0.0
  %618 = vmatprep.subr.mxu0 0.0
  %619 = vmatpush1.msra.mxu0 0.0
  %620 = vmatprep.subr.mxu0 0.0
  %621 = vmatpush1.msra.mxu0 0.0
  %622 = vmatprep.subr.mxu0 0.0
  %623 = vmatpush1.msra.mxu0 0.0
  %624 = vmatprep.subr.mxu0 0.0
  %625 = vmatpush1.msra.mxu0 0.0
  %626 = vmatprep.subr.mxu0 0.0
  %627 = vmatpush1.msra.mxu0 0.0
  %628 = vmatprep.subr.mxu0 0.0
  %629 = vmatpush1.msra.mxu0 0.0
  %630 = vmatprep.subr.mxu0 0.0
  %631 = vmatpush1.msra.mxu0 0.0
  %632 = vmatprep.mubr.f32.mxu0 0.0
  %633 = vmatmul.mubr.f32.gmra.mrb[0].mxu0 %v434
  %v634 = vpop.f32.mrb[0].mxu0
  %v635 = vadd.f32 %v564, %v634
  %v636 = vpop.f32.mrb[0].mxu0
  %637 = vmatprep.mubr.f32.mxu0 0.0
  %638 = vmatmul.mubr.f32.gmra.mrb[0].mxu0 %v435
  %v639 = vpop.f32.mrb[0].mxu0
  %v640 = vadd.f32 %v565, %v639
  %v641 = vpop.f32.mrb[0].mxu0
  %642 = vmatprep.mubr.f32.mxu0 0.0
  %643 = vmatmul.mubr.f32.gmra.mrb[0].mxu0 %v436
  %v644 = vpop.f32.mrb[0].mxu0
  %v645 = vadd.f32 %v566, %v644
  %v646 = vpop.f32.mrb[0].mxu0
  %647 = vmatprep.mubr.f32.mxu0 0.0
  %648 = vmatmul.mubr.f32.gmra.mrb[0].mxu0 %v437
  %v649 = vpop.f32.mrb[0].mxu0
  %v650 = vadd.f32 %v567, %v649
  %v651 = vpop.f32.mrb[0].mxu0
  %652 = vdwg.mxu0
  %s653 = scalar_lea.vmem %s3, 256
  %v654 = vld [vmem:[%s653] sm:$0xff]
  %v655 = vld [vmem:[%s653 + $0x8] sm:$0xff]
  %v656 = vld [vmem:[%s653 + $0x10] sm:$0xff]
  %v657 = vld [vmem:[%s653 + $0x18] sm:$0xff]
  %v658 = vld [vmem:[%s653 + $0x20] sm:$0xff]
  %v659 = vld [vmem:[%s653 + $0x28] sm:$0xff]
  %v660 = vld [vmem:[%s653 + $0x30] sm:$0xff]
  %v661 = vld [vmem:[%s653 + $0x38] sm:$0xff]
  %v662 = vld [vmem:[%s653 + $0x40] sm:$0xff]
  %v663 = vld [vmem:[%s653 + $0x48] sm:$0xff]
  %v664 = vld [vmem:[%s653 + $0x50] sm:$0xff]
  %v665 = vld [vmem:[%s653 + $0x58] sm:$0xff]
  %v666 = vld [vmem:[%s653 + $0x60] sm:$0xff]
  %v667 = vld [vmem:[%s653 + $0x68] sm:$0xff]
  %v668 = vld [vmem:[%s653 + $0x70] sm:$0xff]
  %v669 = vld [vmem:[%s653 + $0x78] sm:$0xff]
  %670 = vmatprep.subr.mxu0 0.0
  %671 = vmatpush1.msra.mxu0 %v654
  %672 = vmatprep.subr.mxu0 0.0
  %673 = vmatpush1.msra.mxu0 %v655
  %674 = vmatprep.subr.mxu0 0.0
  %675 = vmatpush1.msra.mxu0 %v656
  %676 = vmatprep.subr.mxu0 0.0
  %677 = vmatpush1.msra.mxu0 %v657
  %678 = vmatprep.subr.mxu0 0.0
  %679 = vmatpush1.msra.mxu0 %v658
  %680 = vmatprep.subr.mxu0 0.0
  %681 = vmatpush1.msra.mxu0 %v659
  %682 = vmatprep.subr.mxu0 0.0
  %683 = vmatpush1.msra.mxu0 %v660
  %684 = vmatprep.subr.mxu0 0.0
  %685 = vmatpush1.msra.mxu0 %v661
  %686 = vmatprep.subr.mxu0 0.0
  %687 = vmatpush1.msra.mxu0 %v662
  %688 = vmatprep.subr.mxu0 0.0
  %689 = vmatpush1.msra.mxu0 %v663
  %690 = vmatprep.subr.mxu0 0.0
  %691 = vmatpush1.msra.mxu0 %v664
  %692 = vmatprep.subr.mxu0 0.0
  %693 = vmatpush1.msra.mxu0 %v665
  %694 = vmatprep.subr.mxu0 0.0
  %695 = vmatpush1.msra.mxu0 %v666
  %696 = vmatprep.subr.mxu0 0.0
  %697 = vmatpush1.msra.mxu0 %v667
  %698 = vmatprep.subr.mxu0 0.0
  %699 = vmatpush1.msra.mxu0 %v668
  %700 = vmatprep.subr.mxu0 0.0
  %701 = vmatpush1.msra.mxu0 %v669
  %702 = vmatprep.subr.mxu0 0.0
  %703 = vmatpush1.msra.mxu0 0.0
  %704 = vmatprep.subr.mxu0 0.0
  %705 = vmatpush1.msra.mxu0 0.0
  %706 = vmatprep.subr.mxu0 0.0
  %707 = vmatpush1.msra.mxu0 0.0
  %708 = vmatprep.subr.mxu0 0.0
  %709 = vmatpush1.msra.mxu0 0.0
  %710 = vmatprep.subr.mxu0 0.0
  %711 = vmatpush1.msra.mxu0 0.0
  %712 = vmatprep.subr.mxu0 0.0
  %713 = vmatpush1.msra.mxu0 0.0
  %714 = vmatprep.subr.mxu0 0.0
  %715 = vmatpush1.msra.mxu0 0.0
  %716 = vmatprep.subr.mxu0 0.0
  %717 = vmatpush1.msra.mxu0 0.0
  %718 = vmatprep.subr.mxu0 0.0
  %719 = vmatpush1.msra.mxu0 0.0
  %720 = vmatprep.subr.mxu0 0.0
  %721 = vmatpush1.msra.mxu0 0.0
  %722 = vmatprep.subr.mxu0 0.0
  %723 = vmatpush1.msra.mxu0 0.0
  %724 = vmatprep.subr.mxu0 0.0
  %725 = vmatpush1.msra.mxu0 0.0
  %726 = vmatprep.subr.mxu0 0.0
  %727 = vmatpush1.msra.mxu0 0.0
  %728 = vmatprep.subr.mxu0 0.0
  %729 = vmatpush1.msra.mxu0 0.0
  %730 = vmatprep.subr.mxu0 0.0
  %731 = vmatpush1.msra.mxu0 0.0
  %732 = vmatprep.subr.mxu0 0.0
  %733 = vmatpush1.msra.mxu0 0.0
  %734 = vmatprep.mubr.f32.mxu0 0.0
  %735 = vmatmul.mubr.f32.gmra.mrb[0].mxu0 %v434
  %v736 = vpop.f32.mrb[0].mxu0
  %v737 = vadd.f32 0.0, %v736
  %v738 = vpop.f32.mrb[0].mxu0
  %739 = vmatprep.mubr.f32.mxu0 0.0
  %740 = vmatmul.mubr.f32.gmra.mrb[0].mxu0 %v435
  %v741 = vpop.f32.mrb[0].mxu0
  %v742 = vadd.f32 0.0, %v741
  %v743 = vpop.f32.mrb[0].mxu0
  %744 = vmatprep.mubr.f32.mxu0 0.0
  %745 = vmatmul.mubr.f32.gmra.mrb[0].mxu0 %v436
  %v746 = vpop.f32.mrb[0].mxu0
  %v747 = vadd.f32 0.0, %v746
  %v748 = vpop.f32.mrb[0].mxu0
  %749 = vmatprep.mubr.f32.mxu0 0.0
  %750 = vmatmul.mubr.f32.gmra.mrb[0].mxu0 %v437
  %v751 = vpop.f32.mrb[0].mxu0
  %v752 = vadd.f32 0.0, %v751
  %v753 = vpop.f32.mrb[0].mxu0
  %754 = vdwg.mxu0
  %v755 = vrot.slane %v737, 1
  %v756 = vrot.slane %v742, 1
  %v757 = vrot.slane %v747, 1
  %v758 = vrot.slane %v752, 1
  %v759 = vsel %vm398, %v757, %v758
  %v760 = vsel %vm398, %v756, %v757
  %v761 = vsel %vm398, %v755, %v756
  %v762 = vsel %vm398, %v758, %v755
  %v763 = vsel %vm403, %v761, 0.0
  %v764 = vsel %vm404, %v760, 0.0
  %v765 = vsel %vm405, %v759, 0.0
  %v766 = vsel %vm406, %v762, 0.0
  %v767 = vadd.f32 %v635, %v763
  %v768 = vadd.f32 %v640, %v764
  %v769 = vadd.f32 %v645, %v765
  %v770 = vadd.f32 %v650, %v766
  %v771 = vld [vmem:[%s4] sm:$0x1]
  %v773 = vlaneseq
  %v774 = vshrl.u32 %v773, 7
  %v775 = vsub.s32 0, %v774
  %v776 = vrot.slane %v771, %v775
  %v778 = vadd.f32 %v767, %v776
  %v779 = vadd.f32 %v768, %v776
  %v780 = vadd.f32 %v769, %v776
  %v781 = vadd.f32 %v770, %v776
  %vm782 = vcmp.gt.f32.partialorder %v778, 0.0
  %vm783 = vcmp.gt.f32.partialorder %v779, 0.0
  %vm784 = vcmp.gt.f32.partialorder %v780, 0.0
  %vm785 = vcmp.gt.f32.partialorder %v781, 0.0
  %v786 = vmul.f32 %v778, 0.1
  %v787 = vmul.f32 %v779, 0.1
  %v788 = vmul.f32 %v780, 0.1
  %v789 = vmul.f32 %v781, 0.1
  %v790 = vsel %vm782, %v778, %v786
  %v791 = vsel %vm783, %v779, %v787
  %v792 = vsel %vm784, %v780, %v788
  %v793 = vsel %vm785, %v781, %v789
  %s794 = scalar_lea.vmem %s5, 128
  %v795 = vld [vmem:[%s794] sm:$0xff]
  %v796 = vld [vmem:[%s794 + $0x8] sm:$0xff]
  %v797 = vld [vmem:[%s794 + $0x10] sm:$0xff]
  %v798 = vld [vmem:[%s794 + $0x18] sm:$0xff]
  %v799 = vld [vmem:[%s794 + $0x20] sm:$0xff]
  %v800 = vld [vmem:[%s794 + $0x28] sm:$0xff]
  %v801 = vld [vmem:[%s794 + $0x30] sm:$0xff]
  %v802 = vld [vmem:[%s794 + $0x38] sm:$0xff]
  %v803 = vld [vmem:[%s794 + $0x40] sm:$0xff]
  %v804 = vld [vmem:[%s794 + $0x48] sm:$0xff]
  %v805 = vld [vmem:[%s794 + $0x50] sm:$0xff]
  %v806 = vld [vmem:[%s794 + $0x58] sm:$0xff]
  %v807 = vld [vmem:[%s794 + $0x60] sm:$0xff]
  %v808 = vld [vmem:[%s794 + $0x68] sm:$0xff]
  %v809 = vld [vmem:[%s794 + $0x70] sm:$0xff]
  %v810 = vld [vmem:[%s794 + $0x78] sm:$0xff]
  %v811 = vld [vmem:[%s5] sm:$0xff]
  %v812 = vld [vmem:[%s5 + $0x8] sm:$0xff]
  %v813 = vld [vmem:[%s5 + $0x10] sm:$0xff]
  %v814 = vld [vmem:[%s5 + $0x18] sm:$0xff]
  %v815 = vld [vmem:[%s5 + $0x20] sm:$0xff]
  %v816 = vld [vmem:[%s5 + $0x28] sm:$0xff]
  %v817 = vld [vmem:[%s5 + $0x30] sm:$0xff]
  %v818 = vld [vmem:[%s5 + $0x38] sm:$0xff]
  %v819 = vld [vmem:[%s5 + $0x40] sm:$0xff]
  %v820 = vld [vmem:[%s5 + $0x48] sm:$0xff]
  %v821 = vld [vmem:[%s5 + $0x50] sm:$0xff]
  %v822 = vld [vmem:[%s5 + $0x58] sm:$0xff]
  %v823 = vld [vmem:[%s5 + $0x60] sm:$0xff]
  %v824 = vld [vmem:[%s5 + $0x68] sm:$0xff]
  %v825 = vld [vmem:[%s5 + $0x70] sm:$0xff]
  %v826 = vld [vmem:[%s5 + $0x78] sm:$0xff]
  %827 = vmatprep.subr.mxu0 0.0
  %828 = vmatpush1.msra.mxu0 %v811
  %829 = vmatprep.subr.mxu0 0.0
  %830 = vmatpush1.msra.mxu0 %v812
  %831 = vmatprep.subr.mxu0 0.0
  %832 = vmatpush1.msra.mxu0 %v813
  %833 = vmatprep.subr.mxu0 0.0
  %834 = vmatpush1.msra.mxu0 %v814
  %835 = vmatprep.subr.mxu0 0.0
  %836 = vmatpush1.msra.mxu0 %v815
  %837 = vmatprep.subr.mxu0 0.0
  %838 = vmatpush1.msra.mxu0 %v816
  %839 = vmatprep.subr.mxu0 0.0
  %840 = vmatpush1.msra.mxu0 %v817
  %841 = vmatprep.subr.mxu0 0.0
  %842 = vmatpush1.msra.mxu0 %v818
  %843 = vmatprep.subr.mxu0 0.0
  %844 = vmatpush1.msra.mxu0 %v819
  %845 = vmatprep.subr.mxu0 0.0
  %846 = vmatpush1.msra.mxu0 %v820
  %847 = vmatprep.subr.mxu0 0.0
  %848 = vmatpush1.msra.mxu0 %v821
  %849 = vmatprep.subr.mxu0 0.0
  %850 = vmatpush1.msra.mxu0 %v822
  %851 = vmatprep.subr.mxu0 0.0
  %852 = vmatpush1.msra.mxu0 %v823
  %853 = vmatprep.subr.mxu0 0.0
  %854 = vmatpush1.msra.mxu0 %v824
  %855 = vmatprep.subr.mxu0 0.0
  %856 = vmatpush1.msra.mxu0 %v825
  %857 = vmatprep.subr.mxu0 0.0
  %858 = vmatpush1.msra.mxu0 %v826
  %859 = vmatprep.subr.mxu0 0.0
  %860 = vmatpush1.msra.mxu0 0.0
  %861 = vmatprep.subr.mxu0 0.0
  %862 = vmatpush1.msra.mxu0 0.0
  %863 = vmatprep.subr.mxu0 0.0
  %864 = vmatpush1.msra.mxu0 0.0
  %865 = vmatprep.subr.mxu0 0.0
  %866 = vmatpush1.msra.mxu0 0.0
  %867 = vmatprep.subr.mxu0 0.0
  %868 = vmatpush1.msra.mxu0 0.0
  %869 = vmatprep.subr.mxu0 0.0
  %870 = vmatpush1.msra.mxu0 0.0
  %871 = vmatprep.subr.mxu0 0.0
  %872 = vmatpush1.msra.mxu0 0.0
  %873 = vmatprep.subr.mxu0 0.0
  %874 = vmatpush1.msra.mxu0 0.0
  %875 = vmatprep.subr.mxu0 0.0
  %876 = vmatpush1.msra.mxu0 0.0
  %877 = vmatprep.subr.mxu0 0.0
  %878 = vmatpush1.msra.mxu0 0.0
  %879 = vmatprep.subr.mxu0 0.0
  %880 = vmatpush1.msra.mxu0 0.0
  %881 = vmatprep.subr.mxu0 0.0
  %882 = vmatpush1.msra.mxu0 0.0
  %883 = vmatprep.subr.mxu0 0.0
  %884 = vmatpush1.msra.mxu0 0.0
  %885 = vmatprep.subr.mxu0 0.0
  %886 = vmatpush1.msra.mxu0 0.0
  %887 = vmatprep.subr.mxu0 0.0
  %888 = vmatpush1.msra.mxu0 0.0
  %889 = vmatprep.subr.mxu0 0.0
  %890 = vmatpush1.msra.mxu0 0.0
  %891 = vmatprep.mubr.f32.mxu0 0.0
  %892 = vmatmul.mubr.f32.gmra.mrb[0].mxu0 %v790
  %v893 = vpop.f32.mrb[0].mxu0
  %v894 = vadd.f32 0.0, %v893
  %v895 = vpop.f32.mrb[0].mxu0
  %896 = vmatprep.mubr.f32.mxu0 0.0
  %897 = vmatmul.mubr.f32.gmra.mrb[0].mxu0 %v791
  %v898 = vpop.f32.mrb[0].mxu0
  %v899 = vadd.f32 0.0, %v898
  %v900 = vpop.f32.mrb[0].mxu0
  %901 = vmatprep.mubr.f32.mxu0 0.0
  %902 = vmatmul.mubr.f32.gmra.mrb[0].mxu0 %v792
  %v903 = vpop.f32.mrb[0].mxu0
  %v904 = vadd.f32 0.0, %v903
  %v905 = vpop.f32.mrb[0].mxu0
  %906 = vmatprep.mubr.f32.mxu0 0.0
  %907 = vmatmul.mubr.f32.gmra.mrb[0].mxu0 %v793
  %v908 = vpop.f32.mrb[0].mxu0
  %v909 = vadd.f32 0.0, %v908
  %v910 = vpop.f32.mrb[0].mxu0
  %911 = vdwg.mxu0
  %v912 = vrot.slane %v894, 7
  %v913 = vrot.slane %v899, 7
  %v914 = vrot.slane %v904, 7
  %v915 = vrot.slane %v909, 7
  %v916 = vsel %vm202, %v914, %v915
  %v917 = vsel %vm202, %v913, %v914
  %v918 = vsel %vm202, %v912, %v913
  %v919 = vsel %vm202, %v915, %v912
  %v920 = vsel %vm207, %v919, 0.0
  %v921 = vsel %vm208, %v918, 0.0
  %v922 = vsel %vm209, %v917, 0.0
  %v923 = vsel %vm210, %v916, 0.0
  %924 = vmatprep.subr.mxu0 0.0
  %925 = vmatpush1.msra.mxu0 %v795
  %926 = vmatprep.subr.mxu0 0.0
  %927 = vmatpush1.msra.mxu0 %v796
  %928 = vmatprep.subr.mxu0 0.0
  %929 = vmatpush1.msra.mxu0 %v797
  %930 = vmatprep.subr.mxu0 0.0
  %931 = vmatpush1.msra.mxu0 %v798
  %932 = vmatprep.subr.mxu0 0.0
  %933 = vmatpush1.msra.mxu0 %v799
  %934 = vmatprep.subr.mxu0 0.0
  %935 = vmatpush1.msra.mxu0 %v800
  %936 = vmatprep.subr.mxu0 0.0
  %937 = vmatpush1.msra.mxu0 %v801
  %938 = vmatprep.subr.mxu0 0.0
  %939 = vmatpush1.msra.mxu0 %v802
  %940 = vmatprep.subr.mxu0 0.0
  %941 = vmatpush1.msra.mxu0 %v803
  %942 = vmatprep.subr.mxu0 0.0
  %943 = vmatpush1.msra.mxu0 %v804
  %944 = vmatprep.subr.mxu0 0.0
  %945 = vmatpush1.msra.mxu0 %v805
  %946 = vmatprep.subr.mxu0 0.0
  %947 = vmatpush1.msra.mxu0 %v806
  %948 = vmatprep.subr.mxu0 0.0
  %949 = vmatpush1.msra.mxu0 %v807
  %950 = vmatprep.subr.mxu0 0.0
  %951 = vmatpush1.msra.mxu0 %v808
  %952 = vmatprep.subr.mxu0 0.0
  %953 = vmatpush1.msra.mxu0 %v809
  %954 = vmatprep.subr.mxu0 0.0
  %955 = vmatpush1.msra.mxu0 %v810
  %956 = vmatprep.subr.mxu0 0.0
  %957 = vmatpush1.msra.mxu0 0.0
  %958 = vmatprep.subr.mxu0 0.0
  %959 = vmatpush1.msra.mxu0 0.0
  %960 = vmatprep.subr.mxu0 0.0
  %961 = vmatpush1.msra.mxu0 0.0
  %962 = vmatprep.subr.mxu0 0.0
  %963 = vmatpush1.msra.mxu0 0.0
  %964 = vmatprep.subr.mxu0 0.0
  %965 = vmatpush1.msra.mxu0 0.0
  %966 = vmatprep.subr.mxu0 0.0
  %967 = vmatpush1.msra.mxu0 0.0
  %968 = vmatprep.subr.mxu0 0.0
  %969 = vmatpush1.msra.mxu0 0.0
  %970 = vmatprep.subr.mxu0 0.0
  %971 = vmatpush1.msra.mxu0 0.0
  %972 = vmatprep.subr.mxu0 0.0
  %973 = vmatpush1.msra.mxu0 0.0
  %974 = vmatprep.subr.mxu0 0.0
  %975 = vmatpush1.msra.mxu0 0.0
  %976 = vmatprep.subr.mxu0 0.0
  %977 = vmatpush1.msra.mxu0 0.0
  %978 = vmatprep.subr.mxu0 0.0
  %979 = vmatpush1.msra.mxu0 0.0
  %980 = vmatprep.subr.mxu0 0.0
  %981 = vmatpush1.msra.mxu0 0.0
  %982 = vmatprep.subr.mxu0 0.0
  %983 = vmatpush1.msra.mxu0 0.0
  %984 = vmatprep.subr.mxu0 0.0
  %985 = vmatpush1.msra.mxu0 0.0
  %986 = vmatprep.subr.mxu0 0.0
  %987 = vmatpush1.msra.mxu0 0.0
  %988 = vmatprep.mubr.f32.mxu0 0.0
  %989 = vmatmul.mubr.f32.gmra.mrb[0].mxu0 %v790
  %v990 = vpop.f32.mrb[0].mxu0
  %v991 = vadd.f32 %v920, %v990
  %v992 = vpop.f32.mrb[0].mxu0
  %993 = vmatprep.mubr.f32.mxu0 0.0
  %994 = vmatmul.mubr.f32.gmra.mrb[0].mxu0 %v791
  %v995 = vpop.f32.mrb[0].mxu0
  %v996 = vadd.f32 %v921, %v995
  %v997 = vpop.f32.mrb[0].mxu0
  %998 = vmatprep.mubr.f32.mxu0 0.0
  %999 = vmatmul.mubr.f32.gmra.mrb[0].mxu0 %v792
  %v1000 = vpop.f32.mrb[0].mxu0
  %v1001 = vadd.f32 %v922, %v1000
  %v1002 = vpop.f32.mrb[0].mxu0
  %1003 = vmatprep.mubr.f32.mxu0 0.0
  %1004 = vmatmul.mubr.f32.gmra.mrb[0].mxu0 %v793
  %v1005 = vpop.f32.mrb[0].mxu0
  %v1006 = vadd.f32 %v923, %v1005
  %v1007 = vpop.f32.mrb[0].mxu0
  %1008 = vdwg.mxu0
  %s1009 = scalar_lea.vmem %s5, 256
  %v1010 = vld [vmem:[%s1009] sm:$0xff]
  %v1011 = vld [vmem:[%s1009 + $0x8] sm:$0xff]
  %v1012 = vld [vmem:[%s1009 + $0x10] sm:$0xff]
  %v1013 = vld [vmem:[%s1009 + $0x18] sm:$0xff]
  %v1014 = vld [vmem:[%s1009 + $0x20] sm:$0xff]
  %v1015 = vld [vmem:[%s1009 + $0x28] sm:$0xff]
  %v1016 = vld [vmem:[%s1009 + $0x30] sm:$0xff]
  %v1017 = vld [vmem:[%s1009 + $0x38] sm:$0xff]
  %v1018 = vld [vmem:[%s1009 + $0x40] sm:$0xff]
  %v1019 = vld [vmem:[%s1009 + $0x48] sm:$0xff]
  %v1020 = vld [vmem:[%s1009 + $0x50] sm:$0xff]
  %v1021 = vld [vmem:[%s1009 + $0x58] sm:$0xff]
  %v1022 = vld [vmem:[%s1009 + $0x60] sm:$0xff]
  %v1023 = vld [vmem:[%s1009 + $0x68] sm:$0xff]
  %v1024 = vld [vmem:[%s1009 + $0x70] sm:$0xff]
  %v1025 = vld [vmem:[%s1009 + $0x78] sm:$0xff]
  %1026 = vmatprep.subr.mxu0 0.0
  %1027 = vmatpush1.msra.mxu0 %v1010
  %1028 = vmatprep.subr.mxu0 0.0
  %1029 = vmatpush1.msra.mxu0 %v1011
  %1030 = vmatprep.subr.mxu0 0.0
  %1031 = vmatpush1.msra.mxu0 %v1012
  %1032 = vmatprep.subr.mxu0 0.0
  %1033 = vmatpush1.msra.mxu0 %v1013
  %1034 = vmatprep.subr.mxu0 0.0
  %1035 = vmatpush1.msra.mxu0 %v1014
  %1036 = vmatprep.subr.mxu0 0.0
  %1037 = vmatpush1.msra.mxu0 %v1015
  %1038 = vmatprep.subr.mxu0 0.0
  %1039 = vmatpush1.msra.mxu0 %v1016
  %1040 = vmatprep.subr.mxu0 0.0
  %1041 = vmatpush1.msra.mxu0 %v1017
  %1042 = vmatprep.subr.mxu0 0.0
  %1043 = vmatpush1.msra.mxu0 %v1018
  %1044 = vmatprep.subr.mxu0 0.0
  %1045 = vmatpush1.msra.mxu0 %v1019
  %1046 = vmatprep.subr.mxu0 0.0
  %1047 = vmatpush1.msra.mxu0 %v1020
  %1048 = vmatprep.subr.mxu0 0.0
  %1049 = vmatpush1.msra.mxu0 %v1021
  %1050 = vmatprep.subr.mxu0 0.0
  %1051 = vmatpush1.msra.mxu0 %v1022
  %1052 = vmatprep.subr.mxu0 0.0
  %1053 = vmatpush1.msra.mxu0 %v1023
  %1054 = vmatprep.subr.mxu0 0.0
  %1055 = vmatpush1.msra.mxu0 %v1024
  %1056 = vmatprep.subr.mxu0 0.0
  %1057 = vmatpush1.msra.mxu0 %v1025
  %1058 = vmatprep.subr.mxu0 0.0
  %1059 = vmatpush1.msra.mxu0 0.0
  %1060 = vmatprep.subr.mxu0 0.0
  %1061 = vmatpush1.msra.mxu0 0.0
  %1062 = vmatprep.subr.mxu0 0.0
  %1063 = vmatpush1.msra.mxu0 0.0
  %1064 = vmatprep.subr.mxu0 0.0
  %1065 = vmatpush1.msra.mxu0 0.0
  %1066 = vmatprep.subr.mxu0 0.0
  %1067 = vmatpush1.msra.mxu0 0.0
  %1068 = vmatprep.subr.mxu0 0.0
  %1069 = vmatpush1.msra.mxu0 0.0
  %1070 = vmatprep.subr.mxu0 0.0
  %1071 = vmatpush1.msra.mxu0 0.0
  %1072 = vmatprep.subr.mxu0 0.0
  %1073 = vmatpush1.msra.mxu0 0.0
  %1074 = vmatprep.subr.mxu0 0.0
  %1075 = vmatpush1.msra.mxu0 0.0
  %1076 = vmatprep.subr.mxu0 0.0
  %1077 = vmatpush1.msra.mxu0 0.0
  %1078 = vmatprep.subr.mxu0 0.0
  %1079 = vmatpush1.msra.mxu0 0.0
  %1080 = vmatprep.subr.mxu0 0.0
  %1081 = vmatpush1.msra.mxu0 0.0
  %1082 = vmatprep.subr.mxu0 0.0
  %1083 = vmatpush1.msra.mxu0 0.0
  %1084 = vmatprep.subr.mxu0 0.0
  %1085 = vmatpush1.msra.mxu0 0.0
  %1086 = vmatprep.subr.mxu0 0.0
  %1087 = vmatpush1.msra.mxu0 0.0
  %1088 = vmatprep.subr.mxu0 0.0
  %1089 = vmatpush1.msra.mxu0 0.0
  %1090 = vmatprep.mubr.f32.mxu0 0.0
  %1091 = vmatmul.mubr.f32.gmra.mrb[0].mxu0 %v790
  %v1092 = vpop.f32.mrb[0].mxu0
  %v1093 = vadd.f32 0.0, %v1092
  %v1094 = vpop.f32.mrb[0].mxu0
  %1095 = vmatprep.mubr.f32.mxu0 0.0
  %1096 = vmatmul.mubr.f32.gmra.mrb[0].mxu0 %v791
  %v1097 = vpop.f32.mrb[0].mxu0
  %v1098 = vadd.f32 0.0, %v1097
  %v1099 = vpop.f32.mrb[0].mxu0
  %1100 = vmatprep.mubr.f32.mxu0 0.0
  %1101 = vmatmul.mubr.f32.gmra.mrb[0].mxu0 %v792
  %v1102 = vpop.f32.mrb[0].mxu0
  %v1103 = vadd.f32 0.0, %v1102
  %v1104 = vpop.f32.mrb[0].mxu0
  %1105 = vmatprep.mubr.f32.mxu0 0.0
  %1106 = vmatmul.mubr.f32.gmra.mrb[0].mxu0 %v793
  %v1107 = vpop.f32.mrb[0].mxu0
  %v1108 = vadd.f32 0.0, %v1107
  %v1109 = vpop.f32.mrb[0].mxu0
  %1110 = vdwg.mxu0
  %v1111 = vrot.slane %v1093, 1
  %v1112 = vrot.slane %v1098, 1
  %v1113 = vrot.slane %v1103, 1
  %v1114 = vrot.slane %v1108, 1
  %v1115 = vsel %vm398, %v1113, %v1114
  %v1116 = vsel %vm398, %v1112, %v1113
  %v1117 = vsel %vm398, %v1111, %v1112
  %v1118 = vsel %vm398, %v1114, %v1111
  %v1119 = vsel %vm403, %v1117, 0.0
  %v1120 = vsel %vm404, %v1116, 0.0
  %v1121 = vsel %vm405, %v1115, 0.0
  %v1122 = vsel %vm406, %v1118, 0.0
  %v1123 = vadd.f32 %v991, %v1119
  %v1124 = vadd.f32 %v996, %v1120
  %v1125 = vadd.f32 %v1001, %v1121
  %v1126 = vadd.f32 %v1006, %v1122
  %v1127 = vld [vmem:[%s6] sm:$0x1]
  %v1129 = vlaneseq
  %v1130 = vshrl.u32 %v1129, 7
  %v1131 = vsub.s32 0, %v1130
  %v1132 = vrot.slane %v1127, %v1131
  %v1134 = vadd.f32 %v1123, %v1132
  %v1135 = vadd.f32 %v1124, %v1132
  %v1136 = vadd.f32 %v1125, %v1132
  %v1137 = vadd.f32 %v1126, %v1132
  %1138 = vst.msk [vmem:[%s7] sm:$0xff] %vm100, %v1134
  %1139 = vst.msk [vmem:[%s7 + $0x8] sm:$0xff] %vm100, %v1135
  %1140 = vst.msk [vmem:[%s7 + $0x10] sm:$0xff] %vm100, %v1136
  %1141 = vst.msk [vmem:[%s7 + $0x18] sm:$0xff] %vm100, %v1137
  // Predicated region
  $region30: #{mynn_forward.1} parent=0 // pred_check
    _
  $region31: #{mynn_forward.1} parent=0 // pred_check_branch
    %1143 = sbr.rel (0) target = $region33
  $region32: #{mynn_forward.1} parent=0 // pred_region
    _
  $region33: #{mynn_forward.1} parent=0 // pred_fallthru
    _
  // Predicated region
  $region34: #{mynn_forward.1} parent=0 // pred_check
    _
  $region35: #{mynn_forward.1} parent=0 // pred_check_branch
    %1145 = sbr.rel (0) target = $region37
  $region36: #{mynn_forward.1} parent=0 // pred_region
    _
  $region37: #{mynn_forward.1} parent=0 // pred_fallthru
    _

</llo_original>
